<compile_context>
chip_gen: v7x
topology: tpu7x:2x2x1
jax: 0.10.0
libtpu: 0.0.40
codegen_flags: <defaults>
</compile_context>

<pallas_src>
import functools

import jax
import jax.numpy as jnp
import numpy as np
from jax.experimental import pallas as pl
from jax.experimental.pallas import tpu as pltpu

C_IN = 3
C_PAD = 8            # init-conv K padded 3 -> 8 for lane/MXU alignment
C_HID = 64
C_BLK = 128
OUT_LANES = 128      # pooled-feature output padded 64 -> 128 (lane-dense store)
DILATIONS = (1, 2, 4)
N_TYPE = 3
N_SIZE = 7
N_TYPE_SIZE = 13
HEAD_WIDTH = 1 + N_TYPE + N_SIZE + N_TYPE_SIZE + 1  # 25


def wavenet1d_kernel(x_ref,
                     w_init_ref, b_init_ref,
                     wfg0_ref, bfg0_ref, wr0_ref, br0_ref,
                     wfg1_ref, bfg1_ref, wr1_ref, br1_ref,
                     wfg2_ref, bfg2_ref, wr2_ref, br2_ref,
                     out_ref, *, tb, seq_len):
    L = seq_len
    tbl = tb * L

    # (TB, L, 8) bf16 -> (TB*L, 8): lane dim unchanged, leading dims merged.
    x = x_ref[...].reshape(tbl, C_PAD)

    # init_conv: Conv1d(3->64, k=1) == per-timestep matmul (K padded to 8).
    h = jnp.dot(x, w_init_ref[...],
                preferred_element_type=jnp.float32) + b_init_ref[...]   # (TB*L, 64) f32

    # Position of each flattened row within its batch element. Used to apply
    # the conv zero-padding masks and to stop taps leaking across batch rows.
    pos = jax.lax.broadcasted_iota(jnp.int32, (tbl, 1), 0) % L

    blocks = ((wfg0_ref, bfg0_ref, wr0_ref, br0_ref, DILATIONS[0]),
              (wfg1_ref, bfg1_ref, wr1_ref, br1_ref, DILATIONS[1]),
              (wfg2_ref, bfg2_ref, wr2_ref, br2_ref, DILATIONS[2]))
    for wfg, bfg, wr, br, d in blocks:
        hb = h.astype(jnp.bfloat16)                               # center tap x[t]
        # x[t-d] and x[t+d] taps with per-element zero padding.
        # TODO(synk): jnp.roll lowers to slice+concat; switch to pltpu.roll
        # (XLU slot) if a bundle dump shows vld/vst saturating.
        h_m = jnp.where(pos >= d,
                        jnp.roll(h, d, axis=0), 0.0).astype(jnp.bfloat16)
        h_p = jnp.where(pos < L - d,
                        jnp.roll(h, -d, axis=0), 0.0).astype(jnp.bfloat16)
        # Fused tap slab [x[t-d] | x[t] | x[t+d]] -> single K=192 matmul with
        # filter||gate stacked on N (lane-dense 256-wide output).
        slab = jnp.concatenate([h_m, hb, h_p], axis=-1)           # (TB*L, 192) bf16
        y = jnp.dot(slab, wfg[...],
                    preferred_element_type=jnp.float32) + bfg[...]  # (TB*L, 256) f32
        t = jnp.tanh(y[:, :C_BLK])                                # filter half
        g = 0.5 * jnp.tanh(0.5 * y[:, C_BLK:]) + 0.5              # sigmoid, 1 EUP op
        o = (t * g).astype(jnp.bfloat16)                          # (TB*L, 128) bf16
        h = h + jnp.dot(o, wr[...],
                        preferred_element_type=jnp.float32) + br[...]

    # AdaptiveAvgPool1d(1) + squeeze(-1): per-element mean over length.
    pooled = jnp.mean(h.reshape(tb, L, C_HID), axis=1)            # (TB, 64) f32
    padded = jnp.concatenate(
        [pooled, jnp.zeros((tb, OUT_LANES - C_HID), jnp.float32)], axis=-1)
    out_ref[...] = padded[:, None, :]                             # (TB, 1, 128)


def _pick_batch_tile(B, L):
    # ~1024 rows fills the MXU M dim while keeping live activations a few MiB
    # (safe for v7x's 64 MiB VMEM / default scoped limits on all chips).
    tb = max(1, min(B, 1024 // max(L, 1)))
    if B >= 2:
        tb = min(tb, -(-B // 2))   # keep >= 2 grid steps so both v7x TCs get work
    return max(tb, 1)


def xavier_uniform(key, shape, fan_in, fan_out):
    bound = (6.0 / (fan_in + fan_out)) ** 0.5
    return jax.random.uniform(key, shape, jnp.float32, -bound, bound)


def make_params(key):
    keys = iter(jax.random.split(key, 32))
    p = {}
    # init_conv: torch weight (64, 3, 1), xavier(fan_in=3, fan_out=64), zero bias
    w = xavier_uniform(next(keys), (C_HID, C_IN, 1), C_IN, C_HID)
    w_init = jnp.transpose(w[:, :, 0])                               # (3, 64)
    p["w_init"] = jnp.pad(w_init, ((0, C_PAD - C_IN), (0, 0))).astype(jnp.bfloat16)
    p["b_init"] = jnp.zeros((1, C_HID), jnp.float32)
    for i in range(3):
        wf = xavier_uniform(next(keys), (C_BLK, C_HID, 3), C_HID * 3, C_BLK * 3)
        wg = xavier_uniform(next(keys), (C_BLK, C_HID, 3), C_HID * 3, C_BLK * 3)
        wr = xavier_uniform(next(keys), (C_HID, C_BLK, 1), C_BLK, C_HID)
        wf_t = jnp.transpose(wf, (2, 1, 0))                          # (3, 64, 128)
        wg_t = jnp.transpose(wg, (2, 1, 0))                          # (3, 64, 128)
        # Fused filter+gate, taps stacked on K: rows [0:64]=tap(t-d),
        # [64:128]=tap(t), [128:192]=tap(t+d); cols [0:128]=filter, [128:256]=gate.
        w_fg = jnp.concatenate(
            [jnp.concatenate([wf_t[k], wg_t[k]], axis=1) for k in range(3)],
            axis=0)                                                  # (192, 256)
        p[f"wfg{i}"] = w_fg.astype(jnp.bfloat16)
        p[f"bfg{i}"] = jnp.zeros((1, 2 * C_BLK), jnp.float32)
        p[f"wr{i}"] = jnp.transpose(wr[:, :, 0]).astype(jnp.bfloat16)  # (128, 64)
        p[f"br{i}"] = jnp.zeros((1, C_HID), jnp.float32)
    p["w_fc1"] = xavier_uniform(next(keys), (128, 64), 64, 128).T    # (64, 128)
    p["b_fc1"] = jnp.zeros((1, 128), jnp.float32)
    p["w_fc2"] = xavier_uniform(next(keys), (64, 128), 128, 64).T    # (128, 64)
    p["b_fc2"] = jnp.zeros((1, 64), jnp.float32)
    head_dims = (1, N_TYPE, N_SIZE, N_TYPE_SIZE, 1)
    heads = [xavier_uniform(next(keys), (n, 64), 64, n).T for n in head_dims]
    p["w_heads"] = jnp.concatenate(heads, axis=1)                    # (64, 25)
    p["b_heads"] = jnp.zeros((1, HEAD_WIDTH), jnp.float32)
    return p


KERNEL_PARAM_ORDER = (["w_init", "b_init"]
                      + sum([[f"wfg{i}", f"bfg{i}", f"wr{i}", f"br{i}"]
                             for i in range(3)], []))


def _heads_tail(pooled, params):
    # TODO(synk): dropout is identity (eval-mode semantics); no RNG masking.
    z = jax.nn.relu(pooled @ params["w_fc1"] + params["b_fc1"])
    z = jax.nn.relu(z @ params["w_fc2"] + params["b_fc2"])
    logits = z @ params["w_heads"] + params["b_heads"]
    out_check = jax.nn.sigmoid(logits[:, 0:1])
    out_type = logits[:, 1:1 + N_TYPE]
    out_size_cls = logits[:, 1 + N_TYPE:1 + N_TYPE + N_SIZE]
    out_type_size = logits[:, 1 + N_TYPE + N_SIZE:HEAD_WIDTH - 1]
    out_size_reg = jax.nn.softplus(logits[:, HEAD_WIDTH - 1:HEAD_WIDTH])
    return out_check, out_type, out_size_cls, out_type_size, out_size_reg


@jax.jit
def wavenet1d_forward(x_ncl, params):
    # x_ncl: (B, C=3, L) -- torch NCL convention.
    B, c_in, L = x_ncl.shape
    tb = _pick_batch_tile(B, L)
    nb = -(-B // tb)
    b_pad = nb * tb

    # Layout plumbing once in XLA: NCL->NLC, channel pad 3->8, bf16 cast, and
    # batch pad to a multiple of TB (padded rows are zero and sliced off).
    x = jnp.transpose(x_ncl, (0, 2, 1)).astype(jnp.float32)
    x = jnp.pad(x, ((0, b_pad - B), (0, 0), (0, C_PAD - c_in))).astype(jnp.bfloat16)

    weights = [params[name] for name in KERNEL_PARAM_ORDER]

    def full_spec(a):
        nd = a.ndim
        return pl.BlockSpec(a.shape, lambda b, nd=nd: (0,) * nd)

    kernel = functools.partial(wavenet1d_kernel, tb=tb, seq_len=L)

    pooled = pl.pallas_call(
        kernel,
        out_shape=jax.ShapeDtypeStruct((b_pad, 1, OUT_LANES), jnp.float32),
        grid=(nb,),
        in_specs=([pl.BlockSpec((tb, L, C_PAD), lambda b: (b, 0, 0))]
                  + [full_spec(w) for w in weights]),
        out_specs=pl.BlockSpec((tb, 1, OUT_LANES), lambda b: (b, 0, 0)),
        compiler_params=pltpu.CompilerParams(
            dimension_semantics=("parallel",),
            vmem_limit_bytes=32 * 1024 * 1024),
    )(x, *weights)

    pooled = pooled[:B, 0, :C_HID]                                  # (B, 64) f32

    # Head MLP + 5 heads: tiny matmuls, run once in XLA over the whole batch.
    return _heads_tail(pooled, params)


def reference_forward(x_ncl, params):
    """Pure-JAX reference mirroring the kernel's bf16 casts (f32 accumulation)."""
    f32 = jnp.float32
    x = jnp.transpose(x_ncl, (0, 2, 1))
    x = jnp.pad(x, ((0, 0), (0, 0), (0, C_PAD - C_IN)))
    x = x.astype(jnp.bfloat16).astype(f32)
    h = x @ params["w_init"].astype(f32) + params["b_init"]          # (B, L, 64)
    for i, d in enumerate(DILATIONS):
        hb = h.astype(jnp.bfloat16).astype(f32)
        zer = jnp.zeros_like(hb[:, :d, :])
        h_m = jnp.concatenate([zer, hb[:, :-d, :]], axis=1)
        h_p = jnp.concatenate([hb[:, d:, :], zer], axis=1)
        slab = jnp.concatenate([h_m, hb, h_p], axis=-1)
        y = slab @ params[f"wfg{i}"].astype(f32) + params[f"bfg{i}"]
        o = jnp.tanh(y[..., :C_BLK]) * jax.nn.sigmoid(y[..., C_BLK:])
        o = o.astype(jnp.bfloat16).astype(f32)
        h = h + o @ params[f"wr{i}"].astype(f32) + params[f"br{i}"]
    pooled = jnp.mean(h, axis=1)
    return _heads_tail(pooled, params)


if __name__ == "__main__":
    key = jax.random.PRNGKey(0)
    k_param, k_x = jax.random.split(key)
    params = make_params(k_param)

    B, L = 2, 16
    x = jax.random.normal(k_x, (B, C_IN, L), dtype=jnp.float32)  # torch-style NCL

    outs = wavenet1d_forward(x, params)
    outs = jax.block_until_ready(outs)

    expected_shapes = [(B, 1), (B, N_TYPE), (B, N_SIZE), (B, N_TYPE_SIZE), (B, 1)]
    assert [tuple(o.shape) for o in outs] == expected_shapes
    assert all(bool(jnp.all(jnp.isfinite(o))) for o in outs)

    refs = reference_forward(x, params)
    for o, r in zip(outs, refs):
        np.testing.assert_allclose(np.asarray(o), np.asarray(r), rtol=2e-2, atol=2e-2)

    print("KERNEL_OK")
</pallas_src>

<mosaic_0001>
module attributes {stable_mosaic.version = 11 : i64} {
  func.func @wavenet1d_kernel(%arg0: i32, %arg1: memref<1x16x8xbf16, #tpu.memory_space<vmem>>, %arg2: memref<8x64xbf16, #tpu.memory_space<vmem>>, %arg3: memref<1x64xf32, #tpu.memory_space<vmem>>, %arg4: memref<192x256xbf16, #tpu.memory_space<vmem>>, %arg5: memref<1x256xf32, #tpu.memory_space<vmem>>, %arg6: memref<128x64xbf16, #tpu.memory_space<vmem>>, %arg7: memref<1x64xf32, #tpu.memory_space<vmem>>, %arg8: memref<192x256xbf16, #tpu.memory_space<vmem>>, %arg9: memref<1x256xf32, #tpu.memory_space<vmem>>, %arg10: memref<128x64xbf16, #tpu.memory_space<vmem>>, %arg11: memref<1x64xf32, #tpu.memory_space<vmem>>, %arg12: memref<192x256xbf16, #tpu.memory_space<vmem>>, %arg13: memref<1x256xf32, #tpu.memory_space<vmem>>, %arg14: memref<128x64xbf16, #tpu.memory_space<vmem>>, %arg15: memref<1x64xf32, #tpu.memory_space<vmem>>, %arg16: memref<1x1x128xf32, #tpu.memory_space<vmem>>) attributes {dimension_semantics = [#tpu.dimension_semantics<parallel>], iteration_bounds = array<i64: 2>, scalar_prefetch = 0 : i64, scratch_operands = 0 : i64, tpu.core_type = #tpu.core_type<tc>, window_params = [{transform_indices = @transform_0, window_bounds = array<i64: 1, 16, 8>}, {pipeline_mode = #tpu.pipeline_mode<synchronous>, transform_indices = @transform_1, window_bounds = array<i64: 8, 64>}, {pipeline_mode = #tpu.pipeline_mode<synchronous>, transform_indices = @transform_2, window_bounds = array<i64: 1, 64>}, {pipeline_mode = #tpu.pipeline_mode<synchronous>, transform_indices = @transform_3, window_bounds = array<i64: 192, 256>}, {pipeline_mode = #tpu.pipeline_mode<synchronous>, transform_indices = @transform_4, window_bounds = array<i64: 1, 256>}, {pipeline_mode = #tpu.pipeline_mode<synchronous>, transform_indices = @transform_5, window_bounds = array<i64: 128, 64>}, {pipeline_mode = #tpu.pipeline_mode<synchronous>, transform_indices = @transform_6, window_bounds = array<i64: 1, 64>}, {pipeline_mode = #tpu.pipeline_mode<synchronous>, transform_indices = @transform_7, window_bounds = array<i64: 192, 256>}, {pipeline_mode = #tpu.pipeline_mode<synchronous>, transform_indices = @transform_8, window_bounds = array<i64: 1, 256>}, {pipeline_mode = #tpu.pipeline_mode<synchronous>, transform_indices = @transform_9, window_bounds = array<i64: 128, 64>}, {pipeline_mode = #tpu.pipeline_mode<synchronous>, transform_indices = @transform_10, window_bounds = array<i64: 1, 64>}, {pipeline_mode = #tpu.pipeline_mode<synchronous>, transform_indices = @transform_11, window_bounds = array<i64: 192, 256>}, {pipeline_mode = #tpu.pipeline_mode<synchronous>, transform_indices = @transform_12, window_bounds = array<i64: 1, 256>}, {pipeline_mode = #tpu.pipeline_mode<synchronous>, transform_indices = @transform_13, window_bounds = array<i64: 128, 64>}, {pipeline_mode = #tpu.pipeline_mode<synchronous>, transform_indices = @transform_14, window_bounds = array<i64: 1, 64>}, {transform_indices = @transform_15, window_bounds = array<i64: 1, 1, 128>}]} {
    %c0 = arith.constant 0 : index
    %c0_0 = arith.constant 0 : index
    %c0_1 = arith.constant 0 : index
    %0 = vector.load %arg1[%c0, %c0_0, %c0_1] : memref<1x16x8xbf16, #tpu.memory_space<vmem>>, vector<1x16x8xbf16>
    %1 = vector.shape_cast %0 : vector<1x16x8xbf16> to vector<16x8xbf16>
    %c0_2 = arith.constant 0 : index
    %c0_3 = arith.constant 0 : index
    %2 = vector.load %arg2[%c0_2, %c0_3] : memref<8x64xbf16, #tpu.memory_space<vmem>>, vector<8x64xbf16>
    %cst = arith.constant dense<0.000000e+00> : vector<16x64xf32>
    %3 = tpu.matmul %1, %2, %cst {dimension_numbers = #tpu.dot_dimension_numbers<[1], [0], [0], [1], [0, 0, 1, 1], [], []>} : vector<16x8xbf16>, vector<8x64xbf16>, vector<16x64xf32> -> vector<16x64xf32>
    %c0_4 = arith.constant 0 : index
    %c0_5 = arith.constant 0 : index
    %4 = vector.load %arg3[%c0_4, %c0_5] : memref<1x64xf32, #tpu.memory_space<vmem>>, vector<1x64xf32>
    %5 = vector.broadcast %4 : vector<1x64xf32> to vector<16x64xf32>
    %6 = arith.addf %3, %5 : vector<16x64xf32>
    %7 = tpu.iota {dimensions = array<i32: 0>} : vector<16x1xi32>
    %c16_i32 = arith.constant 16 : i32
    %c0_i32 = arith.constant 0 : i32
    %8 = arith.cmpi eq, %c16_i32, %c0_i32 : i32
    %c1_i32 = arith.constant 1 : i32
    %9 = arith.select %8, %c1_i32, %c16_i32 : i32
    %10 = vector.broadcast %9 : i32 to vector<16x1xi32>
    %11 = arith.remsi %7, %10 : vector<16x1xi32>
    %c0_i32_6 = arith.constant 0 : i32
    %12 = vector.broadcast %c0_i32_6 : i32 to vector<16x1xi32>
    %13 = arith.cmpi ne, %11, %12 : vector<16x1xi32>
    %c0_i32_7 = arith.constant 0 : i32
    %14 = vector.broadcast %c0_i32_7 : i32 to vector<16x1xi32>
    %15 = arith.cmpi slt, %11, %14 : vector<16x1xi32>
    %c0_i32_8 = arith.constant 0 : i32
    %16 = arith.cmpi slt, %9, %c0_i32_8 : i32
    %17 = vector.broadcast %16 : i1 to vector<16x1xi1>
    %18 = vector.broadcast %17 : vector<16x1xi1> to vector<16x1xi1>
    %19 = arith.xori %15, %18 : vector<16x1xi1>
    %20 = arith.andi %19, %13 : vector<16x1xi1>
    %21 = vector.broadcast %9 : i32 to vector<16x1xi32>
    %22 = arith.addi %11, %21 : vector<16x1xi32>
    %23 = arith.select %20, %22, %11 : vector<16x1xi1>, vector<16x1xi32>
    %24 = arith.truncf %6 : vector<16x64xf32> to vector<16x64xbf16>
    %c1_i32_9 = arith.constant 1 : i32
    %25 = vector.broadcast %c1_i32_9 : i32 to vector<16x1xi32>
    %26 = arith.cmpi sge, %23, %25 : vector<16x1xi32>
    %27 = vector.extract_strided_slice %6 {offsets = [15, 0], sizes = [1, 64], strides = [1, 1]} : vector<16x64xf32> to vector<1x64xf32>
    %28 = vector.extract_strided_slice %6 {offsets = [0, 0], sizes = [15, 64], strides = [1, 1]} : vector<16x64xf32> to vector<15x64xf32>
    %29 = tpu.concatenate %27, %28 in 0 : vector<1x64xf32>, vector<15x64xf32> -> vector<16x64xf32>
    %cst_10 = arith.constant 0.000000e+00 : f32
    %30 = vector.shape_cast %26 : vector<16x1xi1> to vector<16x1xi1>
    %31 = vector.broadcast %30 : vector<16x1xi1> to vector<16x64xi1>
    %32 = vector.broadcast %cst_10 : f32 to vector<16x64xf32>
    %33 = arith.select %31, %29, %32 : vector<16x64xi1>, vector<16x64xf32>
    %34 = arith.truncf %33 : vector<16x64xf32> to vector<16x64xbf16>
    %c15_i32 = arith.constant 15 : i32
    %35 = vector.broadcast %c15_i32 : i32 to vector<16x1xi32>
    %36 = arith.cmpi slt, %23, %35 : vector<16x1xi32>
    %37 = vector.extract_strided_slice %6 {offsets = [1, 0], sizes = [15, 64], strides = [1, 1]} : vector<16x64xf32> to vector<15x64xf32>
    %38 = vector.extract_strided_slice %6 {offsets = [0, 0], sizes = [1, 64], strides = [1, 1]} : vector<16x64xf32> to vector<1x64xf32>
    %39 = tpu.concatenate %37, %38 in 0 : vector<15x64xf32>, vector<1x64xf32> -> vector<16x64xf32>
    %cst_11 = arith.constant 0.000000e+00 : f32
    %40 = vector.shape_cast %36 : vector<16x1xi1> to vector<16x1xi1>
    %41 = vector.broadcast %40 : vector<16x1xi1> to vector<16x64xi1>
    %42 = vector.broadcast %cst_11 : f32 to vector<16x64xf32>
    %43 = arith.select %41, %39, %42 : vector<16x64xi1>, vector<16x64xf32>
    %44 = arith.truncf %43 : vector<16x64xf32> to vector<16x64xbf16>
    %45 = tpu.concatenate %34, %24, %44 in 1 : vector<16x64xbf16>, vector<16x64xbf16>, vector<16x64xbf16> -> vector<16x192xbf16>
    %c0_12 = arith.constant 0 : index
    %c0_13 = arith.constant 0 : index
    %46 = vector.load %arg4[%c0_12, %c0_13] : memref<192x256xbf16, #tpu.memory_space<vmem>>, vector<192x256xbf16>
    %cst_14 = arith.constant dense<0.000000e+00> : vector<16x256xf32>
    %47 = tpu.matmul %45, %46, %cst_14 {dimension_numbers = #tpu.dot_dimension_numbers<[1], [0], [0], [1], [0, 0, 1, 1], [], []>} : vector<16x192xbf16>, vector<192x256xbf16>, vector<16x256xf32> -> vector<16x256xf32>
    %c0_15 = arith.constant 0 : index
    %c0_16 = arith.constant 0 : index
    %48 = vector.load %arg5[%c0_15, %c0_16] : memref<1x256xf32, #tpu.memory_space<vmem>>, vector<1x256xf32>
    %49 = vector.broadcast %48 : vector<1x256xf32> to vector<16x256xf32>
    %50 = arith.addf %47, %49 : vector<16x256xf32>
    %51 = vector.extract_strided_slice %50 {offsets = [0, 0], sizes = [16, 128], strides = [1, 1]} : vector<16x256xf32> to vector<16x128xf32>
    %52 = math.tanh %51 : vector<16x128xf32>
    %53 = vector.extract_strided_slice %50 {offsets = [0, 128], sizes = [16, 128], strides = [1, 1]} : vector<16x256xf32> to vector<16x128xf32>
    %cst_17 = arith.constant 5.000000e-01 : f32
    %54 = vector.broadcast %cst_17 : f32 to vector<16x128xf32>
    %55 = arith.mulf %54, %53 : vector<16x128xf32>
    %56 = math.tanh %55 : vector<16x128xf32>
    %cst_18 = arith.constant 5.000000e-01 : f32
    %57 = vector.broadcast %cst_18 : f32 to vector<16x128xf32>
    %58 = arith.mulf %57, %56 : vector<16x128xf32>
    %cst_19 = arith.constant 5.000000e-01 : f32
    %59 = vector.broadcast %cst_19 : f32 to vector<16x128xf32>
    %60 = arith.addf %58, %59 : vector<16x128xf32>
    %61 = arith.mulf %52, %60 : vector<16x128xf32>
    %62 = arith.truncf %61 : vector<16x128xf32> to vector<16x128xbf16>
    %c0_20 = arith.constant 0 : index
    %c0_21 = arith.constant 0 : index
    %63 = vector.load %arg6[%c0_20, %c0_21] : memref<128x64xbf16, #tpu.memory_space<vmem>>, vector<128x64xbf16>
    %cst_22 = arith.constant dense<0.000000e+00> : vector<16x64xf32>
    %64 = tpu.matmul %62, %63, %cst_22 {dimension_numbers = #tpu.dot_dimension_numbers<[1], [0], [0], [1], [0, 0, 1, 1], [], []>} : vector<16x128xbf16>, vector<128x64xbf16>, vector<16x64xf32> -> vector<16x64xf32>
    %65 = arith.addf %6, %64 : vector<16x64xf32>
    %c0_23 = arith.constant 0 : index
    %c0_24 = arith.constant 0 : index
    %66 = vector.load %arg7[%c0_23, %c0_24] : memref<1x64xf32, #tpu.memory_space<vmem>>, vector<1x64xf32>
    %67 = vector.broadcast %66 : vector<1x64xf32> to vector<16x64xf32>
    %68 = arith.addf %65, %67 : vector<16x64xf32>
    %69 = arith.truncf %68 : vector<16x64xf32> to vector<16x64xbf16>
    %c2_i32 = arith.constant 2 : i32
    %70 = vector.broadcast %c2_i32 : i32 to vector<16x1xi32>
    %71 = arith.cmpi sge, %23, %70 : vector<16x1xi32>
    %72 = vector.extract_strided_slice %68 {offsets = [14, 0], sizes = [2, 64], strides = [1, 1]} : vector<16x64xf32> to vector<2x64xf32>
    %73 = vector.extract_strided_slice %68 {offsets = [0, 0], sizes = [14, 64], strides = [1, 1]} : vector<16x64xf32> to vector<14x64xf32>
    %74 = tpu.concatenate %72, %73 in 0 : vector<2x64xf32>, vector<14x64xf32> -> vector<16x64xf32>
    %cst_25 = arith.constant 0.000000e+00 : f32
    %75 = vector.shape_cast %71 : vector<16x1xi1> to vector<16x1xi1>
    %76 = vector.broadcast %75 : vector<16x1xi1> to vector<16x64xi1>
    %77 = vector.broadcast %cst_25 : f32 to vector<16x64xf32>
    %78 = arith.select %76, %74, %77 : vector<16x64xi1>, vector<16x64xf32>
    %79 = arith.truncf %78 : vector<16x64xf32> to vector<16x64xbf16>
    %c14_i32 = arith.constant 14 : i32
    %80 = vector.broadcast %c14_i32 : i32 to vector<16x1xi32>
    %81 = arith.cmpi slt, %23, %80 : vector<16x1xi32>
    %82 = vector.extract_strided_slice %68 {offsets = [2, 0], sizes = [14, 64], strides = [1, 1]} : vector<16x64xf32> to vector<14x64xf32>
    %83 = vector.extract_strided_slice %68 {offsets = [0, 0], sizes = [2, 64], strides = [1, 1]} : vector<16x64xf32> to vector<2x64xf32>
    %84 = tpu.concatenate %82, %83 in 0 : vector<14x64xf32>, vector<2x64xf32> -> vector<16x64xf32>
    %cst_26 = arith.constant 0.000000e+00 : f32
    %85 = vector.shape_cast %81 : vector<16x1xi1> to vector<16x1xi1>
    %86 = vector.broadcast %85 : vector<16x1xi1> to vector<16x64xi1>
    %87 = vector.broadcast %cst_26 : f32 to vector<16x64xf32>
    %88 = arith.select %86, %84, %87 : vector<16x64xi1>, vector<16x64xf32>
    %89 = arith.truncf %88 : vector<16x64xf32> to vector<16x64xbf16>
    %90 = tpu.concatenate %79, %69, %89 in 1 : vector<16x64xbf16>, vector<16x64xbf16>, vector<16x64xbf16> -> vector<16x192xbf16>
    %c0_27 = arith.constant 0 : index
    %c0_28 = arith.constant 0 : index
    %91 = vector.load %arg8[%c0_27, %c0_28] : memref<192x256xbf16, #tpu.memory_space<vmem>>, vector<192x256xbf16>
    %cst_29 = arith.constant dense<0.000000e+00> : vector<16x256xf32>
    %92 = tpu.matmul %90, %91, %cst_29 {dimension_numbers = #tpu.dot_dimension_numbers<[1], [0], [0], [1], [0, 0, 1, 1], [], []>} : vector<16x192xbf16>, vector<192x256xbf16>, vector<16x256xf32> -> vector<16x256xf32>
    %c0_30 = arith.constant 0 : index
    %c0_31 = arith.constant 0 : index
    %93 = vector.load %arg9[%c0_30, %c0_31] : memref<1x256xf32, #tpu.memory_space<vmem>>, vector<1x256xf32>
    %94 = vector.broadcast %93 : vector<1x256xf32> to vector<16x256xf32>
    %95 = arith.addf %92, %94 : vector<16x256xf32>
    %96 = vector.extract_strided_slice %95 {offsets = [0, 0], sizes = [16, 128], strides = [1, 1]} : vector<16x256xf32> to vector<16x128xf32>
    %97 = math.tanh %96 : vector<16x128xf32>
    %98 = vector.extract_strided_slice %95 {offsets = [0, 128], sizes = [16, 128], strides = [1, 1]} : vector<16x256xf32> to vector<16x128xf32>
    %cst_32 = arith.constant 5.000000e-01 : f32
    %99 = vector.broadcast %cst_32 : f32 to vector<16x128xf32>
    %100 = arith.mulf %99, %98 : vector<16x128xf32>
    %101 = math.tanh %100 : vector<16x128xf32>
    %cst_33 = arith.constant 5.000000e-01 : f32
    %102 = vector.broadcast %cst_33 : f32 to vector<16x128xf32>
    %103 = arith.mulf %102, %101 : vector<16x128xf32>
    %cst_34 = arith.constant 5.000000e-01 : f32
    %104 = vector.broadcast %cst_34 : f32 to vector<16x128xf32>
    %105 = arith.addf %103, %104 : vector<16x128xf32>
    %106 = arith.mulf %97, %105 : vector<16x128xf32>
    %107 = arith.truncf %106 : vector<16x128xf32> to vector<16x128xbf16>
    %c0_35 = arith.constant 0 : index
    %c0_36 = arith.constant 0 : index
    %108 = vector.load %arg10[%c0_35, %c0_36] : memref<128x64xbf16, #tpu.memory_space<vmem>>, vector<128x64xbf16>
    %cst_37 = arith.constant dense<0.000000e+00> : vector<16x64xf32>
    %109 = tpu.matmul %107, %108, %cst_37 {dimension_numbers = #tpu.dot_dimension_numbers<[1], [0], [0], [1], [0, 0, 1, 1], [], []>} : vector<16x128xbf16>, vector<128x64xbf16>, vector<16x64xf32> -> vector<16x64xf32>
    %110 = arith.addf %68, %109 : vector<16x64xf32>
    %c0_38 = arith.constant 0 : index
    %c0_39 = arith.constant 0 : index
    %111 = vector.load %arg11[%c0_38, %c0_39] : memref<1x64xf32, #tpu.memory_space<vmem>>, vector<1x64xf32>
    %112 = vector.broadcast %111 : vector<1x64xf32> to vector<16x64xf32>
    %113 = arith.addf %110, %112 : vector<16x64xf32>
    %114 = arith.truncf %113 : vector<16x64xf32> to vector<16x64xbf16>
    %c4_i32 = arith.constant 4 : i32
    %115 = vector.broadcast %c4_i32 : i32 to vector<16x1xi32>
    %116 = arith.cmpi sge, %23, %115 : vector<16x1xi32>
    %117 = vector.extract_strided_slice %113 {offsets = [12, 0], sizes = [4, 64], strides = [1, 1]} : vector<16x64xf32> to vector<4x64xf32>
    %118 = vector.extract_strided_slice %113 {offsets = [0, 0], sizes = [12, 64], strides = [1, 1]} : vector<16x64xf32> to vector<12x64xf32>
    %119 = tpu.concatenate %117, %118 in 0 : vector<4x64xf32>, vector<12x64xf32> -> vector<16x64xf32>
    %cst_40 = arith.constant 0.000000e+00 : f32
    %120 = vector.shape_cast %116 : vector<16x1xi1> to vector<16x1xi1>
    %121 = vector.broadcast %120 : vector<16x1xi1> to vector<16x64xi1>
    %122 = vector.broadcast %cst_40 : f32 to vector<16x64xf32>
    %123 = arith.select %121, %119, %122 : vector<16x64xi1>, vector<16x64xf32>
    %124 = arith.truncf %123 : vector<16x64xf32> to vector<16x64xbf16>
    %c12_i32 = arith.constant 12 : i32
    %125 = vector.broadcast %c12_i32 : i32 to vector<16x1xi32>
    %126 = arith.cmpi slt, %23, %125 : vector<16x1xi32>
    %127 = vector.extract_strided_slice %113 {offsets = [4, 0], sizes = [12, 64], strides = [1, 1]} : vector<16x64xf32> to vector<12x64xf32>
    %128 = vector.extract_strided_slice %113 {offsets = [0, 0], sizes = [4, 64], strides = [1, 1]} : vector<16x64xf32> to vector<4x64xf32>
    %129 = tpu.concatenate %127, %128 in 0 : vector<12x64xf32>, vector<4x64xf32> -> vector<16x64xf32>
    %cst_41 = arith.constant 0.000000e+00 : f32
    %130 = vector.shape_cast %126 : vector<16x1xi1> to vector<16x1xi1>
    %131 = vector.broadcast %130 : vector<16x1xi1> to vector<16x64xi1>
    %132 = vector.broadcast %cst_41 : f32 to vector<16x64xf32>
    %133 = arith.select %131, %129, %132 : vector<16x64xi1>, vector<16x64xf32>
    %134 = arith.truncf %133 : vector<16x64xf32> to vector<16x64xbf16>
    %135 = tpu.concatenate %124, %114, %134 in 1 : vector<16x64xbf16>, vector<16x64xbf16>, vector<16x64xbf16> -> vector<16x192xbf16>
    %c0_42 = arith.constant 0 : index
    %c0_43 = arith.constant 0 : index
    %136 = vector.load %arg12[%c0_42, %c0_43] : memref<192x256xbf16, #tpu.memory_space<vmem>>, vector<192x256xbf16>
    %cst_44 = arith.constant dense<0.000000e+00> : vector<16x256xf32>
    %137 = tpu.matmul %135, %136, %cst_44 {dimension_numbers = #tpu.dot_dimension_numbers<[1], [0], [0], [1], [0, 0, 1, 1], [], []>} : vector<16x192xbf16>, vector<192x256xbf16>, vector<16x256xf32> -> vector<16x256xf32>
    %c0_45 = arith.constant 0 : index
    %c0_46 = arith.constant 0 : index
    %138 = vector.load %arg13[%c0_45, %c0_46] : memref<1x256xf32, #tpu.memory_space<vmem>>, vector<1x256xf32>
    %139 = vector.broadcast %138 : vector<1x256xf32> to vector<16x256xf32>
    %140 = arith.addf %137, %139 : vector<16x256xf32>
    %141 = vector.extract_strided_slice %140 {offsets = [0, 0], sizes = [16, 128], strides = [1, 1]} : vector<16x256xf32> to vector<16x128xf32>
    %142 = math.tanh %141 : vector<16x128xf32>
    %143 = vector.extract_strided_slice %140 {offsets = [0, 128], sizes = [16, 128], strides = [1, 1]} : vector<16x256xf32> to vector<16x128xf32>
    %cst_47 = arith.constant 5.000000e-01 : f32
    %144 = vector.broadcast %cst_47 : f32 to vector<16x128xf32>
    %145 = arith.mulf %144, %143 : vector<16x128xf32>
    %146 = math.tanh %145 : vector<16x128xf32>
    %cst_48 = arith.constant 5.000000e-01 : f32
    %147 = vector.broadcast %cst_48 : f32 to vector<16x128xf32>
    %148 = arith.mulf %147, %146 : vector<16x128xf32>
    %cst_49 = arith.constant 5.000000e-01 : f32
    %149 = vector.broadcast %cst_49 : f32 to vector<16x128xf32>
    %150 = arith.addf %148, %149 : vector<16x128xf32>
    %151 = arith.mulf %142, %150 : vector<16x128xf32>
    %152 = arith.truncf %151 : vector<16x128xf32> to vector<16x128xbf16>
    %c0_50 = arith.constant 0 : index
    %c0_51 = arith.constant 0 : index
    %153 = vector.load %arg14[%c0_50, %c0_51] : memref<128x64xbf16, #tpu.memory_space<vmem>>, vector<128x64xbf16>
    %cst_52 = arith.constant dense<0.000000e+00> : vector<16x64xf32>
    %154 = tpu.matmul %152, %153, %cst_52 {dimension_numbers = #tpu.dot_dimension_numbers<[1], [0], [0], [1], [0, 0, 1, 1], [], []>} : vector<16x128xbf16>, vector<128x64xbf16>, vector<16x64xf32> -> vector<16x64xf32>
    %155 = arith.addf %113, %154 : vector<16x64xf32>
    %c0_53 = arith.constant 0 : index
    %c0_54 = arith.constant 0 : index
    %156 = vector.load %arg15[%c0_53, %c0_54] : memref<1x64xf32, #tpu.memory_space<vmem>>, vector<1x64xf32>
    %157 = vector.broadcast %156 : vector<1x64xf32> to vector<16x64xf32>
    %158 = arith.addf %155, %157 : vector<16x64xf32>
    %159 = vector.shape_cast %158 : vector<16x64xf32> to vector<1x16x64xf32>
    %cst_55 = arith.constant dense<0.000000e+00> : vector<1x64xf32>
    %160 = vector.multi_reduction <add>, %159, %cst_55 [1] : vector<1x16x64xf32> to vector<1x64xf32>
    %cst_56 = arith.constant 1.600000e+01 : f32
    %161 = vector.broadcast %cst_56 : f32 to vector<1x64xf32>
    %162 = arith.divf %160, %161 : vector<1x64xf32>
    %cst_57 = arith.constant 0.000000e+00 : f32
    %163 = vector.broadcast %cst_57 : f32 to vector<1x64xf32>
    %164 = tpu.concatenate %162, %163 in 1 : vector<1x64xf32>, vector<1x64xf32> -> vector<1x128xf32>
    %165 = vector.shape_cast %164 : vector<1x128xf32> to vector<1x1x128xf32>
    %c0_58 = arith.constant 0 : index
    %c0_59 = arith.constant 0 : index
    %c0_60 = arith.constant 0 : index
    %166 = vector.load %arg16[%c0_58, %c0_59, %c0_60] : memref<1x1x128xf32, #tpu.memory_space<vmem>>, vector<1x1x128xf32>
    tpu.vector_store %arg16[%c0_58, %c0_59, %c0_60], %165 {strides = array<i32>} : memref<1x1x128xf32, #tpu.memory_space<vmem>>, vector<1x1x128xf32>,
    return
  }
  func.func @transform_0(%arg0: i32) -> (i32, i32, i32) {
    %c0_i32 = arith.constant 0 : i32
    %c0_i32_0 = arith.constant 0 : i32
    %c0_i32_1 = arith.constant 0 : i32
    return %arg0, %c0_i32, %c0_i32_0 : i32, i32, i32
  }
  func.func @transform_1(%arg0: i32) -> (i32, i32) {
    %c0_i32 = arith.constant 0 : i32
    %c0_i32_0 = arith.constant 0 : i32
    %c0_i32_1 = arith.constant 0 : i32
    return %c0_i32, %c0_i32_0 : i32, i32
  }
  func.func @transform_2(%arg0: i32) -> (i32, i32) {
    %c0_i32 = arith.constant 0 : i32
    %c0_i32_0 = arith.constant 0 : i32
    %c0_i32_1 = arith.constant 0 : i32
    return %c0_i32, %c0_i32_0 : i32, i32
  }
  func.func @transform_3(%arg0: i32) -> (i32, i32) {
    %c0_i32 = arith.constant 0 : i32
    %c0_i32_0 = arith.constant 0 : i32
    %c0_i32_1 = arith.constant 0 : i32
    return %c0_i32, %c0_i32_0 : i32, i32
  }
  func.func @transform_4(%arg0: i32) -> (i32, i32) {
    %c0_i32 = arith.constant 0 : i32
    %c0_i32_0 = arith.constant 0 : i32
    %c0_i32_1 = arith.constant 0 : i32
    return %c0_i32, %c0_i32_0 : i32, i32
  }
  func.func @transform_5(%arg0: i32) -> (i32, i32) {
    %c0_i32 = arith.constant 0 : i32
    %c0_i32_0 = arith.constant 0 : i32
    %c0_i32_1 = arith.constant 0 : i32
    return %c0_i32, %c0_i32_0 : i32, i32
  }
  func.func @transform_6(%arg0: i32) -> (i32, i32) {
    %c0_i32 = arith.constant 0 : i32
    %c0_i32_0 = arith.constant 0 : i32
    %c0_i32_1 = arith.constant 0 : i32
    return %c0_i32, %c0_i32_0 : i32, i32
  }
  func.func @transform_7(%arg0: i32) -> (i32, i32) {
    %c0_i32 = arith.constant 0 : i32
    %c0_i32_0 = arith.constant 0 : i32
    %c0_i32_1 = arith.constant 0 : i32
    return %c0_i32, %c0_i32_0 : i32, i32
  }
  func.func @transform_8(%arg0: i32) -> (i32, i32) {
    %c0_i32 = arith.constant 0 : i32
    %c0_i32_0 = arith.constant 0 : i32
    %c0_i32_1 = arith.constant 0 : i32
    return %c0_i32, %c0_i32_0 : i32, i32
  }
  func.func @transform_9(%arg0: i32) -> (i32, i32) {
    %c0_i32 = arith.constant 0 : i32
    %c0_i32_0 = arith.constant 0 : i32
    %c0_i32_1 = arith.constant 0 : i32
    return %c0_i32, %c0_i32_0 : i32, i32
  }
  func.func @transform_10(%arg0: i32) -> (i32, i32) {
    %c0_i32 = arith.constant 0 : i32
    %c0_i32_0 = arith.constant 0 : i32
    %c0_i32_1 = arith.constant 0 : i32
    return %c0_i32, %c0_i32_0 : i32, i32
  }
  func.func @transform_11(%arg0: i32) -> (i32, i32) {
    %c0_i32 = arith.constant 0 : i32
    %c0_i32_0 = arith.constant 0 : i32
    %c0_i32_1 = arith.constant 0 : i32
    return %c0_i32, %c0_i32_0 : i32, i32
  }
  func.func @transform_12(%arg0: i32) -> (i32, i32) {
    %c0_i32 = arith.constant 0 : i32
    %c0_i32_0 = arith.constant 0 : i32
    %c0_i32_1 = arith.constant 0 : i32
    return %c0_i32, %c0_i32_0 : i32, i32
  }
  func.func @transform_13(%arg0: i32) -> (i32, i32) {
    %c0_i32 = arith.constant 0 : i32
    %c0_i32_0 = arith.constant 0 : i32
    %c0_i32_1 = arith.constant 0 : i32
    return %c0_i32, %c0_i32_0 : i32, i32
  }
  func.func @transform_14(%arg0: i32) -> (i32, i32) {
    %c0_i32 = arith.constant 0 : i32
    %c0_i32_0 = arith.constant 0 : i32
    %c0_i32_1 = arith.constant 0 : i32
    return %c0_i32, %c0_i32_0 : i32, i32
  }
  func.func @transform_15(%arg0: i32) -> (i32, i32, i32) {
    %c0_i32 = arith.constant 0 : i32
    %c0_i32_0 = arith.constant 0 : i32
    %c0_i32_1 = arith.constant 0 : i32
    return %arg0, %c0_i32, %c0_i32_0 : i32, i32, i32
  }
}

</mosaic_0001>

<llo_original>
// kernel: wavenet1d_forward.1
$region0: #{wavenet1d_forward.1}
  #allocation0 [shape = 'u32[]', space=smem, size = 0x4, offset = 0x4, fixed_abs, tag = 'smem constant byte address 0x4 - core index']
  #allocation1 [shape = 'u32[144,128]{1,0:T(1,128)}', space=vmem, size = 0x12000, scoped, tag = 'internal scratch']
  %s0 = inlined_call_operand.vmem [shape: bf16[2,16,8], index: 0, kind: input, shape index: {}]
  %s1 = inlined_call_operand.hbm [shape: bf16[8,64], index: 1, kind: input, shape index: {}]
  %s2 = inlined_call_operand.vmem [shape: f32[1,64], index: 2, kind: input, shape index: {}]
  %s3 = inlined_call_operand.vmem [shape: bf16[192,256], index: 3, kind: input, shape index: {}]
  %s4 = inlined_call_operand.hbm [shape: f32[1,256], index: 4, kind: input, shape index: {}]
  %s5 = inlined_call_operand.vmem [shape: bf16[128,64], index: 5, kind: input, shape index: {}]
  %s6 = inlined_call_operand.hbm [shape: f32[1,64], index: 6, kind: input, shape index: {}]
  %s7 = inlined_call_operand.vmem [shape: bf16[192,256], index: 7, kind: input, shape index: {}]
  %s8 = inlined_call_operand.hbm [shape: f32[1,256], index: 8, kind: input, shape index: {}]
  %s9 = inlined_call_operand.vmem [shape: bf16[128,64], index: 9, kind: input, shape index: {}]
  %s10 = inlined_call_operand.hbm [shape: f32[1,64], index: 10, kind: input, shape index: {}]
  %s11 = inlined_call_operand.hbm [shape: bf16[192,256], index: 11, kind: input, shape index: {}]
  %s12 = inlined_call_operand.hbm [shape: f32[1,256], index: 12, kind: input, shape index: {}]
  %s13 = inlined_call_operand.vmem [shape: bf16[128,64], index: 13, kind: input, shape index: {}]
  %s14 = inlined_call_operand.hbm [shape: f32[1,64], index: 14, kind: input, shape index: {}]
  %s15 = inlined_call_operand.vmem [shape: f32[2,1,128], index: 15, kind: output, shape index: {}]
  %s16 = sld [smem:[#allocation0]]
  $region125: #{wavenet1d_forward.1} parent=0
    _
  %s18 = ssub.s32 1, %s16
  %s19 = scalar_select 0, %s18, %s16
  $region1: #{wavenet1d_forward.1} parent=0
    #allocation2 [shape = 'u8[2048]{0}', space=vmem, size = 0x800, scoped, tag = 'input window, operand 1, single buffered']
    #allocation3 [shape = 's32[2]{0}', space=sflag, size = 0x8, scoped, tag = 'scoped memory for wavenet1d_forward.1']
    #allocation4 [shape = 'u8[1024]{0}', space=vmem, size = 0x400, scoped, tag = 'input window, operand 4, single buffered']
    #allocation5 [shape = 's32[1]{0}', space=sflag, size = 0x4, scoped, tag = 'scoped memory for wavenet1d_forward.1']
    #allocation6 [shape = 'u8[512]{0}', space=vmem, size = 0x400, scoped, tag = 'input window, operand 6, single buffered']
    #allocation7 [shape = 'u8[1024]{0}', space=vmem, size = 0x400, scoped, tag = 'input window, operand 8, single buffered']
    #allocation8 [shape = 's32[1]{0}', space=sflag, size = 0x4, scoped, tag = 'scoped memory for wavenet1d_forward.1']
    #allocation9 [shape = 'u8[512]{0}', space=vmem, size = 0x400, scoped, tag = 'input window, operand 10, single buffered']
    #allocation10 [shape = 'u8[98304]{0}', space=vmem, size = 0x18000, scoped, tag = 'input window, operand 11, single buffered']
    #allocation11 [shape = 's32[1]{0}', space=sflag, size = 0x4, scoped, tag = 'scoped memory for wavenet1d_forward.1']
    #allocation12 [shape = 'u8[1024]{0}', space=vmem, size = 0x400, scoped, tag = 'input window, operand 12, single buffered']
    #allocation13 [shape = 'u8[512]{0}', space=vmem, size = 0x400, scoped, tag = 'input window, operand 14, single buffered']
    #allocation14 [shape = 's32[1]{0}', space=sflag, size = 0x4, scoped, tag = 'scoped memory for wavenet1d_forward.1']
    %20 = vsyncpa [#allocation3], 0
    %21 = vsyncpa [#allocation5], 0
    %22 = vsyncpa [#allocation8], 0
    %23 = vsyncpa [#allocation11], 0
    %24 = vsyncpa [#allocation14], 0
    loop: start=0, step=1, limit=4
    $region2: #{wavenet1d_forward.1} parent=1 // loop_pre_header
      _
    $region3: #{wavenet1d_forward.1} parent=1 // loop_header
      %s26 = sphi 0, %s30
      %p27 = scmp.ge.s32.totalorder %s26, 4
      %s36 = sphi 0, %s38
      %s39 = sphi 0, %s36
      %s40 = sphi 0, %s39
      %s56 = sphi 0, %s40
      %s60 = sphi 0, %s60
      %s62 = sphi 0, %s60
      %s63 = sphi 0, %s62
      %s77 = sphi 0, %s63
      %s81 = sphi 0, %s81
      %s83 = sphi 0, %s81
      %s84 = sphi 0, %s83
      %s98 = sphi 0, %s84
      %s102 = sphi 0, %s102
      %s104 = sphi 0, %s102
      %s105 = sphi 0, %s104
      %s119 = sphi 0, %s105
      %s123 = sphi 0, %s123
      %s125 = sphi 0, %s123
      %s126 = sphi 0, %s125
      %s140 = sphi 0, %s126
      %s144 = sphi 0, %s144
      %s146 = sphi 0, %s144
      %s147 = sphi 0, %s146
      %s161 = sphi 0, %s147
      %s165 = sphi 0, %s165
      %s167 = sphi 0, %s165
      %s168 = sphi 0, %s167
      %s182 = sphi 0, %s168
      %s186 = sphi 0, %s186
      %s188 = sphi 0, %s186
      %s189 = sphi 0, %s188
      %s203 = sphi 0, %s189
      %s207 = sphi 0, %s207
      %s209 = sphi 0, %s207
      %s210 = sphi 0, %s209
      %s224 = sphi 0, %s210
      %s228 = sphi 0, %s228
      %s230 = sphi 0, %s228
      %s231 = sphi 0, %s230
      %s245 = sphi 0, %s231
      %s249 = sphi 0, %s249
      %s251 = sphi 0, %s249
      %s252 = sphi 0, %s251
      %s266 = sphi 0, %s252
      %s270 = sphi 0, %s270
      %s272 = sphi 0, %s270
      %s273 = sphi 0, %s272
      %s287 = sphi 0, %s273
      %s291 = sphi 0, %s291
      %s293 = sphi 0, %s291
      %s294 = sphi 0, %s293
      %s308 = sphi 0, %s294
      %s312 = sphi 0, %s312
      %s314 = sphi 0, %s312
      %s315 = sphi 0, %s314
      %s329 = sphi 0, %s315
      %s333 = sphi 0, %s333
      %s335 = sphi 0, %s333
      %s336 = sphi 0, %s335
      %s350 = sphi 0, %s336
      %s356 = sphi 0, %s358
      %s359 = sphi 0, %s356
      %s360 = sphi 0, %s359
      %s376 = sphi 0, %s360
    $region4: #{wavenet1d_forward.1} parent=1 // loop_header_branch
      %29 = sbr.rel (%p27) target = $region8
    $region5: #{wavenet1d_forward.1} parent=1 // loop_body
      %s31 = ssub.s32 %s26, 1
      %s32 = ssub.s32 %s26, 2
      %s33 = sadd.s32 %s26, 1
      %s34 = ssub.s32 %s26, %s33
      %p35 = scmp.eq.s32.totalorder %s34, 0
      %s37 = sadd.s32 %s36, 1
      %s38 = scalar_select %p35, %s36, %s37
      %p41 = pneg %p35
      %p42 = scmp.eq.s32.totalorder %s26, 1
      %p43 = por %p41, %p42
      %p44 = scmp.ne.s32.totalorder %s36, %s39
      %p45 = scmp.eq.s32.totalorder %s26, 0
      %p46 = por %p44, %p45
      %p47 = scmp.ne.s32.totalorder %s36, %s39
      %p48 = scmp.eq.s32.totalorder %s31, 1
      %p49 = por %p47, %p48
      %p50 = scmp.ne.s32.totalorder %s39, %s40
      %p51 = scmp.eq.s32.totalorder %s31, 0
      %p52 = por %p50, %p51
      %p53 = scmp.ne.s32.totalorder %s39, %s40
      %p54 = scmp.eq.s32.totalorder %s32, 1
      %p55 = por %p53, %p54
      %p57 = scmp.ne.s32.totalorder %s40, %s56
      %p58 = scmp.eq.s32.totalorder %s32, 0
      %p59 = por %p57, %p58
      %s61 = sadd.s32 %s60, 1
      %p64 = scmp.eq.s32.totalorder %s26, 1
      %p65 = scmp.ne.s32.totalorder %s60, %s62
      %p66 = scmp.eq.s32.totalorder %s26, 0
      %p67 = por %p65, %p66
      %p68 = scmp.ne.s32.totalorder %s60, %s62
      %p69 = scmp.eq.s32.totalorder %s31, 1
      %p70 = por %p68, %p69
      %p71 = scmp.ne.s32.totalorder %s62, %s63
      %p72 = scmp.eq.s32.totalorder %s31, 0
      %p73 = por %p71, %p72
      %p74 = scmp.ne.s32.totalorder %s62, %s63
      %p75 = scmp.eq.s32.totalorder %s32, 1
      %p76 = por %p74, %p75
      %p78 = scmp.ne.s32.totalorder %s63, %s77
      %p79 = scmp.eq.s32.totalorder %s32, 0
      %p80 = por %p78, %p79
      %s82 = sadd.s32 %s81, 1
      %p85 = scmp.eq.s32.totalorder %s26, 1
      %p86 = scmp.ne.s32.totalorder %s81, %s83
      %p87 = scmp.eq.s32.totalorder %s26, 0
      %p88 = por %p86, %p87
      %p89 = scmp.ne.s32.totalorder %s81, %s83
      %p90 = scmp.eq.s32.totalorder %s31, 1
      %p91 = por %p89, %p90
      %p92 = scmp.ne.s32.totalorder %s83, %s84
      %p93 = scmp.eq.s32.totalorder %s31, 0
      %p94 = por %p92, %p93
      %p95 = scmp.ne.s32.totalorder %s83, %s84
      %p96 = scmp.eq.s32.totalorder %s32, 1
      %p97 = por %p95, %p96
      %p99 = scmp.ne.s32.totalorder %s84, %s98
      %p100 = scmp.eq.s32.totalorder %s32, 0
      %p101 = por %p99, %p100
      %s103 = sadd.s32 %s102, 1
      %p106 = scmp.eq.s32.totalorder %s26, 1
      %p107 = scmp.ne.s32.totalorder %s102, %s104
      %p108 = scmp.eq.s32.totalorder %s26, 0
      %p109 = por %p107, %p108
      %p110 = scmp.ne.s32.totalorder %s102, %s104
      %p111 = scmp.eq.s32.totalorder %s31, 1
      %p112 = por %p110, %p111
      %p113 = scmp.ne.s32.totalorder %s104, %s105
      %p114 = scmp.eq.s32.totalorder %s31, 0
      %p115 = por %p113, %p114
      %p116 = scmp.ne.s32.totalorder %s104, %s105
      %p117 = scmp.eq.s32.totalorder %s32, 1
      %p118 = por %p116, %p117
      %p120 = scmp.ne.s32.totalorder %s105, %s119
      %p121 = scmp.eq.s32.totalorder %s32, 0
      %p122 = por %p120, %p121
      %s124 = sadd.s32 %s123, 1
      %p127 = scmp.eq.s32.totalorder %s26, 1
      %p128 = scmp.ne.s32.totalorder %s123, %s125
      %p129 = scmp.eq.s32.totalorder %s26, 0
      %p130 = por %p128, %p129
      %p131 = scmp.ne.s32.totalorder %s123, %s125
      %p132 = scmp.eq.s32.totalorder %s31, 1
      %p133 = por %p131, %p132
      %p134 = scmp.ne.s32.totalorder %s125, %s126
      %p135 = scmp.eq.s32.totalorder %s31, 0
      %p136 = por %p134, %p135
      %p137 = scmp.ne.s32.totalorder %s125, %s126
      %p138 = scmp.eq.s32.totalorder %s32, 1
      %p139 = por %p137, %p138
      %p141 = scmp.ne.s32.totalorder %s126, %s140
      %p142 = scmp.eq.s32.totalorder %s32, 0
      %p143 = por %p141, %p142
      %s145 = sadd.s32 %s144, 1
      %p148 = scmp.eq.s32.totalorder %s26, 1
      %p149 = scmp.ne.s32.totalorder %s144, %s146
      %p150 = scmp.eq.s32.totalorder %s26, 0
      %p151 = por %p149, %p150
      %p152 = scmp.ne.s32.totalorder %s144, %s146
      %p153 = scmp.eq.s32.totalorder %s31, 1
      %p154 = por %p152, %p153
      %p155 = scmp.ne.s32.totalorder %s146, %s147
      %p156 = scmp.eq.s32.totalorder %s31, 0
      %p157 = por %p155, %p156
      %p158 = scmp.ne.s32.totalorder %s146, %s147
      %p159 = scmp.eq.s32.totalorder %s32, 1
      %p160 = por %p158, %p159
      %p162 = scmp.ne.s32.totalorder %s147, %s161
      %p163 = scmp.eq.s32.totalorder %s32, 0
      %p164 = por %p162, %p163
      %s166 = sadd.s32 %s165, 1
      %p169 = scmp.eq.s32.totalorder %s26, 1
      %p170 = scmp.ne.s32.totalorder %s165, %s167
      %p171 = scmp.eq.s32.totalorder %s26, 0
      %p172 = por %p170, %p171
      %p173 = scmp.ne.s32.totalorder %s165, %s167
      %p174 = scmp.eq.s32.totalorder %s31, 1
      %p175 = por %p173, %p174
      %p176 = scmp.ne.s32.totalorder %s167, %s168
      %p177 = scmp.eq.s32.totalorder %s31, 0
      %p178 = por %p176, %p177
      %p179 = scmp.ne.s32.totalorder %s167, %s168
      %p180 = scmp.eq.s32.totalorder %s32, 1
      %p181 = por %p179, %p180
      %p183 = scmp.ne.s32.totalorder %s168, %s182
      %p184 = scmp.eq.s32.totalorder %s32, 0
      %p185 = por %p183, %p184
      %s187 = sadd.s32 %s186, 1
      %p190 = scmp.eq.s32.totalorder %s26, 1
      %p191 = scmp.ne.s32.totalorder %s186, %s188
      %p192 = scmp.eq.s32.totalorder %s26, 0
      %p193 = por %p191, %p192
      %p194 = scmp.ne.s32.totalorder %s186, %s188
      %p195 = scmp.eq.s32.totalorder %s31, 1
      %p196 = por %p194, %p195
      %p197 = scmp.ne.s32.totalorder %s188, %s189
      %p198 = scmp.eq.s32.totalorder %s31, 0
      %p199 = por %p197, %p198
      %p200 = scmp.ne.s32.totalorder %s188, %s189
      %p201 = scmp.eq.s32.totalorder %s32, 1
      %p202 = por %p200, %p201
      %p204 = scmp.ne.s32.totalorder %s189, %s203
      %p205 = scmp.eq.s32.totalorder %s32, 0
      %p206 = por %p204, %p205
      %s208 = sadd.s32 %s207, 1
      %p211 = scmp.eq.s32.totalorder %s26, 1
      %p212 = scmp.ne.s32.totalorder %s207, %s209
      %p213 = scmp.eq.s32.totalorder %s26, 0
      %p214 = por %p212, %p213
      %p215 = scmp.ne.s32.totalorder %s207, %s209
      %p216 = scmp.eq.s32.totalorder %s31, 1
      %p217 = por %p215, %p216
      %p218 = scmp.ne.s32.totalorder %s209, %s210
      %p219 = scmp.eq.s32.totalorder %s31, 0
      %p220 = por %p218, %p219
      %p221 = scmp.ne.s32.totalorder %s209, %s210
      %p222 = scmp.eq.s32.totalorder %s32, 1
      %p223 = por %p221, %p222
      %p225 = scmp.ne.s32.totalorder %s210, %s224
      %p226 = scmp.eq.s32.totalorder %s32, 0
      %p227 = por %p225, %p226
      %s229 = sadd.s32 %s228, 1
      %p232 = scmp.eq.s32.totalorder %s26, 1
      %p233 = scmp.ne.s32.totalorder %s228, %s230
      %p234 = scmp.eq.s32.totalorder %s26, 0
      %p235 = por %p233, %p234
      %p236 = scmp.ne.s32.totalorder %s228, %s230
      %p237 = scmp.eq.s32.totalorder %s31, 1
      %p238 = por %p236, %p237
      %p239 = scmp.ne.s32.totalorder %s230, %s231
      %p240 = scmp.eq.s32.totalorder %s31, 0
      %p241 = por %p239, %p240
      %p242 = scmp.ne.s32.totalorder %s230, %s231
      %p243 = scmp.eq.s32.totalorder %s32, 1
      %p244 = por %p242, %p243
      %p246 = scmp.ne.s32.totalorder %s231, %s245
      %p247 = scmp.eq.s32.totalorder %s32, 0
      %p248 = por %p246, %p247
      %s250 = sadd.s32 %s249, 1
      %p253 = scmp.eq.s32.totalorder %s26, 1
      %p254 = scmp.ne.s32.totalorder %s249, %s251
      %p255 = scmp.eq.s32.totalorder %s26, 0
      %p256 = por %p254, %p255
      %p257 = scmp.ne.s32.totalorder %s249, %s251
      %p258 = scmp.eq.s32.totalorder %s31, 1
      %p259 = por %p257, %p258
      %p260 = scmp.ne.s32.totalorder %s251, %s252
      %p261 = scmp.eq.s32.totalorder %s31, 0
      %p262 = por %p260, %p261
      %p263 = scmp.ne.s32.totalorder %s251, %s252
      %p264 = scmp.eq.s32.totalorder %s32, 1
      %p265 = por %p263, %p264
      %p267 = scmp.ne.s32.totalorder %s252, %s266
      %p268 = scmp.eq.s32.totalorder %s32, 0
      %p269 = por %p267, %p268
      %s271 = sadd.s32 %s270, 1
      %p274 = scmp.eq.s32.totalorder %s26, 1
      %p275 = scmp.ne.s32.totalorder %s270, %s272
      %p276 = scmp.eq.s32.totalorder %s26, 0
      %p277 = por %p275, %p276
      %p278 = scmp.ne.s32.totalorder %s270, %s272
      %p279 = scmp.eq.s32.totalorder %s31, 1
      %p280 = por %p278, %p279
      %p281 = scmp.ne.s32.totalorder %s272, %s273
      %p282 = scmp.eq.s32.totalorder %s31, 0
      %p283 = por %p281, %p282
      %p284 = scmp.ne.s32.totalorder %s272, %s273
      %p285 = scmp.eq.s32.totalorder %s32, 1
      %p286 = por %p284, %p285
      %p288 = scmp.ne.s32.totalorder %s273, %s287
      %p289 = scmp.eq.s32.totalorder %s32, 0
      %p290 = por %p288, %p289
      %s292 = sadd.s32 %s291, 1
      %p295 = scmp.eq.s32.totalorder %s26, 1
      %p296 = scmp.ne.s32.totalorder %s291, %s293
      %p297 = scmp.eq.s32.totalorder %s26, 0
      %p298 = por %p296, %p297
      %p299 = scmp.ne.s32.totalorder %s291, %s293
      %p300 = scmp.eq.s32.totalorder %s31, 1
      %p301 = por %p299, %p300
      %p302 = scmp.ne.s32.totalorder %s293, %s294
      %p303 = scmp.eq.s32.totalorder %s31, 0
      %p304 = por %p302, %p303
      %p305 = scmp.ne.s32.totalorder %s293, %s294
      %p306 = scmp.eq.s32.totalorder %s32, 1
      %p307 = por %p305, %p306
      %p309 = scmp.ne.s32.totalorder %s294, %s308
      %p310 = scmp.eq.s32.totalorder %s32, 0
      %p311 = por %p309, %p310
      %s313 = sadd.s32 %s312, 1
      %p316 = scmp.eq.s32.totalorder %s26, 1
      %p317 = scmp.ne.s32.totalorder %s312, %s314
      %p318 = scmp.eq.s32.totalorder %s26, 0
      %p319 = por %p317, %p318
      %p320 = scmp.ne.s32.totalorder %s312, %s314
      %p321 = scmp.eq.s32.totalorder %s31, 1
      %p322 = por %p320, %p321
      %p323 = scmp.ne.s32.totalorder %s314, %s315
      %p324 = scmp.eq.s32.totalorder %s31, 0
      %p325 = por %p323, %p324
      %p326 = scmp.ne.s32.totalorder %s314, %s315
      %p327 = scmp.eq.s32.totalorder %s32, 1
      %p328 = por %p326, %p327
      %p330 = scmp.ne.s32.totalorder %s315, %s329
      %p331 = scmp.eq.s32.totalorder %s32, 0
      %p332 = por %p330, %p331
      %s334 = sadd.s32 %s333, 1
      %p337 = scmp.eq.s32.totalorder %s26, 1
      %p338 = scmp.ne.s32.totalorder %s333, %s335
      %p339 = scmp.eq.s32.totalorder %s26, 0
      %p340 = por %p338, %p339
      %p341 = scmp.ne.s32.totalorder %s333, %s335
      %p342 = scmp.eq.s32.totalorder %s31, 1
      %p343 = por %p341, %p342
      %p344 = scmp.ne.s32.totalorder %s335, %s336
      %p345 = scmp.eq.s32.totalorder %s31, 0
      %p346 = por %p344, %p345
      %p347 = scmp.ne.s32.totalorder %s335, %s336
      %p348 = scmp.eq.s32.totalorder %s32, 1
      %p349 = por %p347, %p348
      %p351 = scmp.ne.s32.totalorder %s336, %s350
      %p352 = scmp.eq.s32.totalorder %s32, 0
      %p353 = por %p351, %p352
      %s354 = ssub.s32 %s26, %s33
      %p355 = scmp.eq.s32.totalorder %s354, 0
      %s357 = sadd.s32 %s356, 1
      %s358 = scalar_select %p355, %s356, %s357
      %p361 = pneg %p355
      %p362 = scmp.eq.s32.totalorder %s26, 1
      %p363 = por %p361, %p362
      %p364 = scmp.ne.s32.totalorder %s356, %s359
      %p365 = scmp.eq.s32.totalorder %s26, 0
      %p366 = por %p364, %p365
      %p367 = scmp.ne.s32.totalorder %s356, %s359
      %p368 = scmp.eq.s32.totalorder %s31, 1
      %p369 = por %p367, %p368
      %p370 = scmp.ne.s32.totalorder %s359, %s360
      %p371 = scmp.eq.s32.totalorder %s31, 0
      %p372 = por %p370, %p371
      %p373 = scmp.ne.s32.totalorder %s359, %s360
      %p374 = scmp.eq.s32.totalorder %s32, 1
      %p375 = por %p373, %p374
      %p377 = scmp.ne.s32.totalorder %s360, %s376
      %p378 = scmp.eq.s32.totalorder %s32, 0
      %p379 = por %p377, %p378
      %p380 = scmp.le.s32.totalorder 1, %s26
      %p381 = scmp.lt.s32.totalorder %s26, 3
      %p382 = pnand %p380, %p381
      %p383 = pneg %p382
      // Predicated region
      $region9: #{wavenet1d_forward.1} parent=5 // pred_check
        _
      $region10: #{wavenet1d_forward.1} parent=5 // pred_check_branch
        %385 = sbr.rel (%p382) target = $region12
      $region11: #{wavenet1d_forward.1} parent=5 // pred_region
        %s386 = ssub.s32 %s26, 1
        // Predicated region
        $region13: #{wavenet1d_forward.1} parent=11 // pred_check
          %p387 = pneg %p73
        $region14: #{wavenet1d_forward.1} parent=11 // pred_check_branch
          %389 = sbr.rel (%p387) target = $region16
        $region15: #{wavenet1d_forward.1} parent=11 // pred_region
          %s391 = ssub.s32 64, 64
          %392 = vsyncadd [#allocation3], %s391
          %s394 = sshll.u32 [#allocation2], 4
          %s395 = int_to_ptr.vmem [resolvable:$true] %s394
          %397 = dma.hbm_to_vmem [thread:$0]  %s1, 64, %s395, [#allocation3]
        $region16: #{wavenet1d_forward.1} parent=11 // pred_fallthru
          _
        // Predicated region
        $region17: #{wavenet1d_forward.1} parent=11 // pred_check
          %p398 = pneg %p94
        $region18: #{wavenet1d_forward.1} parent=11 // pred_check_branch
          %400 = sbr.rel (%p398) target = $region20
        $region19: #{wavenet1d_forward.1} parent=11 // pred_region
          _
        $region20: #{wavenet1d_forward.1} parent=11 // pred_fallthru
          _
        // Predicated region
        $region21: #{wavenet1d_forward.1} parent=11 // pred_check
          %p401 = pneg %p115
        $region22: #{wavenet1d_forward.1} parent=11 // pred_check_branch
          %403 = sbr.rel (%p401) target = $region24
        $region23: #{wavenet1d_forward.1} parent=11 // pred_region
          _
        $region24: #{wavenet1d_forward.1} parent=11 // pred_fallthru
          _
        // Predicated region
        $region25: #{wavenet1d_forward.1} parent=11 // pred_check
          %p404 = pneg %p136
        $region26: #{wavenet1d_forward.1} parent=11 // pred_check_branch
          %406 = sbr.rel (%p404) target = $region28
        $region27: #{wavenet1d_forward.1} parent=11 // pred_region
          %s408 = ssub.s32 32, 32
          %409 = vsyncadd [#allocation5], %s408
          %s411 = sshll.u32 [#allocation4], 4
          %s412 = int_to_ptr.vmem [resolvable:$true] %s411
          %414 = dma.hbm_to_vmem [thread:$0]  %s4, 32, %s412, [#allocation5]
        $region28: #{wavenet1d_forward.1} parent=11 // pred_fallthru
          _
        // Predicated region
        $region29: #{wavenet1d_forward.1} parent=11 // pred_check
          %p415 = pneg %p157
        $region30: #{wavenet1d_forward.1} parent=11 // pred_check_branch
          %417 = sbr.rel (%p415) target = $region32
        $region31: #{wavenet1d_forward.1} parent=11 // pred_region
          _
        $region32: #{wavenet1d_forward.1} parent=11 // pred_fallthru
          _
        // Predicated region
        $region33: #{wavenet1d_forward.1} parent=11 // pred_check
          %p418 = pneg %p178
        $region34: #{wavenet1d_forward.1} parent=11 // pred_check_branch
          %420 = sbr.rel (%p418) target = $region36
        $region35: #{wavenet1d_forward.1} parent=11 // pred_region
          %s422 = ssub.s32 16, 16
          %423 = vsyncadd [#allocation5], %s422
          %s425 = sshll.u32 [#allocation6], 4
          %s426 = int_to_ptr.vmem [resolvable:$true] %s425
          %428 = dma.hbm_to_vmem [thread:$0]  %s6, 16, %s426, [#allocation5]
        $region36: #{wavenet1d_forward.1} parent=11 // pred_fallthru
          _
        // Predicated region
        $region37: #{wavenet1d_forward.1} parent=11 // pred_check
          %p429 = pneg %p199
        $region38: #{wavenet1d_forward.1} parent=11 // pred_check_branch
          %431 = sbr.rel (%p429) target = $region40
        $region39: #{wavenet1d_forward.1} parent=11 // pred_region
          _
        $region40: #{wavenet1d_forward.1} parent=11 // pred_fallthru
          _
        // Predicated region
        $region41: #{wavenet1d_forward.1} parent=11 // pred_check
          %p432 = pneg %p220
        $region42: #{wavenet1d_forward.1} parent=11 // pred_check_branch
          %434 = sbr.rel (%p432) target = $region44
        $region43: #{wavenet1d_forward.1} parent=11 // pred_region
          %s436 = ssub.s32 32, 32
          %437 = vsyncadd [#allocation8], %s436
          %s439 = sshll.u32 [#allocation7], 4
          %s440 = int_to_ptr.vmem [resolvable:$true] %s439
          %442 = dma.hbm_to_vmem [thread:$0]  %s8, 32, %s440, [#allocation8]
        $region44: #{wavenet1d_forward.1} parent=11 // pred_fallthru
          _
        // Predicated region
        $region45: #{wavenet1d_forward.1} parent=11 // pred_check
          %p443 = pneg %p241
        $region46: #{wavenet1d_forward.1} parent=11 // pred_check_branch
          %445 = sbr.rel (%p443) target = $region48
        $region47: #{wavenet1d_forward.1} parent=11 // pred_region
          _
        $region48: #{wavenet1d_forward.1} parent=11 // pred_fallthru
          _
        // Predicated region
        $region49: #{wavenet1d_forward.1} parent=11 // pred_check
          %p446 = pneg %p262
        $region50: #{wavenet1d_forward.1} parent=11 // pred_check_branch
          %448 = sbr.rel (%p446) target = $region52
        $region51: #{wavenet1d_forward.1} parent=11 // pred_region
          %s450 = ssub.s32 16, 16
          %451 = vsyncadd [#allocation8], %s450
          %s453 = sshll.u32 [#allocation9], 4
          %s454 = int_to_ptr.vmem [resolvable:$true] %s453
          %456 = dma.hbm_to_vmem [thread:$0]  %s10, 16, %s454, [#allocation8]
        $region52: #{wavenet1d_forward.1} parent=11 // pred_fallthru
          _
        // Predicated region
        $region53: #{wavenet1d_forward.1} parent=11 // pred_check
          %p457 = pneg %p283
        $region54: #{wavenet1d_forward.1} parent=11 // pred_check_branch
          %459 = sbr.rel (%p457) target = $region56
        $region55: #{wavenet1d_forward.1} parent=11 // pred_region
          %s461 = ssub.s32 3072, 3072
          %462 = vsyncadd [#allocation11], %s461
          %s463 = sshll.u32 [#allocation10], 4
          %s464 = int_to_ptr.vmem [resolvable:$true] %s463
          %469 = dma.hbm_to_vmem [thread:$0]  %s11, 3072, %s464, [#allocation11], 128, 128, 8
        $region56: #{wavenet1d_forward.1} parent=11 // pred_fallthru
          _
        // Predicated region
        $region57: #{wavenet1d_forward.1} parent=11 // pred_check
          %p470 = pneg %p304
        $region58: #{wavenet1d_forward.1} parent=11 // pred_check_branch
          %472 = sbr.rel (%p470) target = $region60
        $region59: #{wavenet1d_forward.1} parent=11 // pred_region
          %s474 = ssub.s32 32, 32
          %475 = vsyncadd [#allocation11], %s474
          %s477 = sshll.u32 [#allocation12], 4
          %s478 = int_to_ptr.vmem [resolvable:$true] %s477
          %480 = dma.hbm_to_vmem [thread:$0]  %s12, 32, %s478, [#allocation11]
        $region60: #{wavenet1d_forward.1} parent=11 // pred_fallthru
          _
        // Predicated region
        $region61: #{wavenet1d_forward.1} parent=11 // pred_check
          %p481 = pneg %p325
        $region62: #{wavenet1d_forward.1} parent=11 // pred_check_branch
          %483 = sbr.rel (%p481) target = $region64
        $region63: #{wavenet1d_forward.1} parent=11 // pred_region
          _
        $region64: #{wavenet1d_forward.1} parent=11 // pred_fallthru
          _
        // Predicated region
        $region65: #{wavenet1d_forward.1} parent=11 // pred_check
          %p484 = pneg %p346
        $region66: #{wavenet1d_forward.1} parent=11 // pred_check_branch
          %486 = sbr.rel (%p484) target = $region68
        $region67: #{wavenet1d_forward.1} parent=11 // pred_region
          %s488 = ssub.s32 16, 16
          %489 = vsyncadd [#allocation14], %s488
          %s491 = sshll.u32 [#allocation13], 4
          %s492 = int_to_ptr.vmem [resolvable:$true] %s491
          %494 = dma.hbm_to_vmem [thread:$0]  %s14, 16, %s492, [#allocation14]
        $region68: #{wavenet1d_forward.1} parent=11 // pred_fallthru
          _
      $region12: #{wavenet1d_forward.1} parent=5 // pred_fallthru
        _
      %p495 = scmp.lt.s32.totalorder %s26, 2
      // Predicated region
      $region69: #{wavenet1d_forward.1} parent=5 // pred_check
        %p496 = pneg %p495
      $region70: #{wavenet1d_forward.1} parent=5 // pred_check_branch
        %498 = sbr.rel (%p496) target = $region72
      $region71: #{wavenet1d_forward.1} parent=5 // pred_region
        // Predicated region
        $region73: #{wavenet1d_forward.1} parent=71 // pred_check
          %p499 = pneg %p46
        $region74: #{wavenet1d_forward.1} parent=71 // pred_check_branch
          %501 = sbr.rel (%p499) target = $region76
        $region75: #{wavenet1d_forward.1} parent=71 // pred_region
          %p502 = scmp.lt.s32.totalorder %s26, 1
          %s503 = scalar_select %p502, %s26, 1
          %s504 = smul.addr %s503, 2
          %s505 = smul.addr %s504, 4
          %s506 = scalar_lea.vmem %s0, %s505
        $region76: #{wavenet1d_forward.1} parent=71 // pred_fallthru
          _
      $region72: #{wavenet1d_forward.1} parent=5 // pred_fallthru
        _
      %p507 = scmp.le.s32.totalorder 1, %s26
      %p508 = scmp.lt.s32.totalorder %s26, 3
      %p509 = pnand %p507, %p508
      %p510 = pneg %p509
      // Predicated region
      $region77: #{wavenet1d_forward.1} parent=5 // pred_check
        _
      $region78: #{wavenet1d_forward.1} parent=5 // pred_check_branch
        %512 = sbr.rel (%p509) target = $region80
      $region79: #{wavenet1d_forward.1} parent=5 // pred_region
        %s513 = ssub.s32 %s26, 1
        // Predicated region
        $region81: #{wavenet1d_forward.1} parent=79 // pred_check
          %p514 = pneg %p73
        $region82: #{wavenet1d_forward.1} parent=79 // pred_check_branch
          %516 = sbr.rel (%p514) target = $region84
        $region83: #{wavenet1d_forward.1} parent=79 // pred_region
          %517 = dma.done [#allocation3], 64
        $region84: #{wavenet1d_forward.1} parent=79 // pred_fallthru
          _
        // Predicated region
        $region85: #{wavenet1d_forward.1} parent=79 // pred_check
          %p518 = pneg %p136
        $region86: #{wavenet1d_forward.1} parent=79 // pred_check_branch
          %520 = sbr.rel (%p518) target = $region88
        $region87: #{wavenet1d_forward.1} parent=79 // pred_region
          %521 = dma.done [#allocation5], 32
        $region88: #{wavenet1d_forward.1} parent=79 // pred_fallthru
          _
        // Predicated region
        $region89: #{wavenet1d_forward.1} parent=79 // pred_check
          %p522 = pneg %p178
        $region90: #{wavenet1d_forward.1} parent=79 // pred_check_branch
          %524 = sbr.rel (%p522) target = $region92
        $region91: #{wavenet1d_forward.1} parent=79 // pred_region
          %525 = dma.done [#allocation5], 16
        $region92: #{wavenet1d_forward.1} parent=79 // pred_fallthru
          _
        // Predicated region
        $region93: #{wavenet1d_forward.1} parent=79 // pred_check
          %p526 = pneg %p220
        $region94: #{wavenet1d_forward.1} parent=79 // pred_check_branch
          %528 = sbr.rel (%p526) target = $region96
        $region95: #{wavenet1d_forward.1} parent=79 // pred_region
          %529 = dma.done [#allocation8], 32
        $region96: #{wavenet1d_forward.1} parent=79 // pred_fallthru
          _
        // Predicated region
        $region97: #{wavenet1d_forward.1} parent=79 // pred_check
          %p530 = pneg %p262
        $region98: #{wavenet1d_forward.1} parent=79 // pred_check_branch
          %532 = sbr.rel (%p530) target = $region100
        $region99: #{wavenet1d_forward.1} parent=79 // pred_region
          %533 = dma.done [#allocation8], 16
        $region100: #{wavenet1d_forward.1} parent=79 // pred_fallthru
          _
        // Predicated region
        $region101: #{wavenet1d_forward.1} parent=79 // pred_check
          %p534 = pneg %p283
        $region102: #{wavenet1d_forward.1} parent=79 // pred_check_branch
          %536 = sbr.rel (%p534) target = $region104
        $region103: #{wavenet1d_forward.1} parent=79 // pred_region
          %537 = dma.done [#allocation11], 3072
        $region104: #{wavenet1d_forward.1} parent=79 // pred_fallthru
          _
        // Predicated region
        $region105: #{wavenet1d_forward.1} parent=79 // pred_check
          %p538 = pneg %p304
        $region106: #{wavenet1d_forward.1} parent=79 // pred_check_branch
          %540 = sbr.rel (%p538) target = $region108
        $region107: #{wavenet1d_forward.1} parent=79 // pred_region
          %541 = dma.done [#allocation11], 32
        $region108: #{wavenet1d_forward.1} parent=79 // pred_fallthru
          _
        // Predicated region
        $region109: #{wavenet1d_forward.1} parent=79 // pred_check
          %p542 = pneg %p346
        $region110: #{wavenet1d_forward.1} parent=79 // pred_check_branch
          %544 = sbr.rel (%p542) target = $region112
        $region111: #{wavenet1d_forward.1} parent=79 // pred_region
          %545 = dma.done [#allocation14], 16
        $region112: #{wavenet1d_forward.1} parent=79 // pred_fallthru
          _
        %p546 = scmp.lt.s32.totalorder %s31, 1
        %s547 = scalar_select %p546, %s31, 1
        %s548 = smul.addr %s547, 2
        %s549 = smul.addr %s548, 4
        %s550 = scalar_lea.vmem %s0, %s549
        %p551 = pneg %p52
        %p552 = pneg %p49
        %p553 = pneg %p73
        %p554 = pneg %p70
        %p555 = pneg %p94
        %p556 = pneg %p91
        %p557 = pneg %p115
        %p558 = pneg %p112
        %p559 = pneg %p136
        %p560 = pneg %p133
        %p561 = pneg %p157
        %p562 = pneg %p154
        %p563 = pneg %p178
        %p564 = pneg %p175
        %p565 = pneg %p199
        %p566 = pneg %p196
        %p567 = pneg %p220
        %p568 = pneg %p217
        %p569 = pneg %p241
        %p570 = pneg %p238
        %p571 = pneg %p262
        %p572 = pneg %p259
        %p573 = pneg %p283
        %p574 = pneg %p280
        %p575 = pneg %p304
        %p576 = pneg %p301
        %p577 = pneg %p325
        %p578 = pneg %p322
        %p579 = pneg %p346
        %p580 = pneg %p343
        %p581 = pneg %p372
        %p582 = pneg %p369
        %p583 = scmp.lt.s32.totalorder %s31, 1
        %s584 = scalar_select %p583, %s31, 1
        %s585 = scalar_lea.vmem %s15, %s584
        %p586 = scmp.lt.s32.totalorder %s31, 1
        %s587 = scalar_select %p586, %s31, 1
        %s588 = smul.addr %s587, 2
        %s589 = smul.addr %s588, 4
        %s590 = scalar_lea.vmem %s0, %s589
        %p591 = scmp.lt.s32.totalorder %s31, 1
        %s592 = scalar_select %p591, %s31, 1
        %s593 = scalar_lea.vmem %s15, %s592
        %v595 = vld [vmem:[%s590] sm:$0xf]
        %v596 = vld [vmem:[%s590 + $0x4] sm:$0xf]
        %v597 = vld [vmem:[#allocation2] sm:$0xf]
        %v598 = vld [vmem:[%s2] sm:$0x1]
        %v600 = vlaneseq
        %v601 = vshrl.u32 %v600, 7
        %v602 = vsub.s32 0, %v601
        %v603 = vrot.slane %v598, %v602
        %v607 = vunpack.c.l.b16 %v595
        %v608 = vunpack.c.l.b16 %v596
        %v609 = vpack.c.b16 %v608, %v607
        %vm610 = vcmask 64512
        %v612 = vsel %vm610, %v609, 0
        %vm614 = vcmask 1043456
        %v616 = vsel %vm614, %v597, 0
        %618 = vmatprep.subr.bf16.mxu0 0
        %619 = vmatpush1.bf16.msra.mxu0 %v616
        %620 = vmatprep.subr.bf16.mxu0 0
        %621 = vmatpush1.bf16.msra.mxu0 0
        %622 = vmatprep.subr.bf16.mxu0 0
        %623 = vmatpush1.bf16.msra.mxu0 0
        %624 = vmatprep.subr.bf16.mxu0 0
        %625 = vmatpush1.bf16.msra.mxu0 0
        %626 = vmatprep.subr.bf16.mxu0 0
        %627 = vmatpush1.bf16.msra.mxu0 0
        %628 = vmatprep.subr.bf16.mxu0 0
        %629 = vmatpush1.bf16.msra.mxu0 0
        %630 = vmatprep.subr.bf16.mxu0 0
        %631 = vmatpush1.bf16.msra.mxu0 0
        %632 = vmatprep.subr.bf16.mxu0 0
        %633 = vmatpush1.bf16.msra.mxu0 0
        %634 = vmatprep.subr.bf16.mxu0 0
        %635 = vmatpush1.bf16.msra.mxu0 0
        %636 = vmatprep.subr.bf16.mxu0 0
        %637 = vmatpush1.bf16.msra.mxu0 0
        %638 = vmatprep.subr.bf16.mxu0 0
        %639 = vmatpush1.bf16.msra.mxu0 0
        %640 = vmatprep.subr.bf16.mxu0 0
        %641 = vmatpush1.bf16.msra.mxu0 0
        %642 = vmatprep.subr.bf16.mxu0 0
        %643 = vmatpush1.bf16.msra.mxu0 0
        %644 = vmatprep.subr.bf16.mxu0 0
        %645 = vmatpush1.bf16.msra.mxu0 0
        %646 = vmatprep.subr.bf16.mxu0 0
        %647 = vmatpush1.bf16.msra.mxu0 0
        %648 = vmatprep.subr.bf16.mxu0 0
        %649 = vmatpush1.bf16.msra.mxu0 0
        %650 = vmatprep.mubr.bf16.mxu0 0
        %651 = vmatmul.mubr.bf16.gmra.mrb[0].mxu0 %v612
        %v652 = vpop.f32.mrb[0].mxu0
        %v653 = vadd.f32 %v603, %v652
        %v654 = vpop.f32.mrb[0].mxu0
        %v655 = vpop.f32.mrb[0].mxu0
        %v656 = vadd.f32 %v603, %v655
        %v657 = vpop.f32.mrb[0].mxu0
        %658 = vdwg.mxu0
        %v659 = vlaneseq
        %v660 = vshrl.u32 %v659, 7
        %v661 = vadd.s32 %v660, 8
        %vm662 = vcmp.lt.s32.totalorder %v660, 0
        %v663 = vsub.s32 0, %v660
        %v664 = vsel %vm662, %v663, %v660
        %v665 = vshrl.u32 %v664, 4
        %v666 = vand.u32 %v664, 15
        %v667 = vsub.s32 0, %v666
        %v668 = vsel %vm662, %v667, %v666
        %vm669 = vcmp.lt.s32.totalorder %v661, 0
        %v670 = vsub.s32 0, %v661
        %v671 = vsel %vm669, %v670, %v661
        %v672 = vshrl.u32 %v671, 4
        %v673 = vand.u32 %v671, 15
        %v674 = vsub.s32 0, %v673
        %v675 = vsel %vm669, %v674, %v673
        %vm676 = vcmp.ne.s32.totalorder %v668, 0
        %vm677 = vcmp.ne.s32.totalorder %v675, 0
        %vm678 = vcmp.lt.s32.totalorder %v668, 0
        %vm679 = vcmp.lt.s32.totalorder %v675, 0
        %vm680 = vmand %vm678, %vm676
        %vm681 = vmand %vm679, %vm677
        %v682 = vadd.s32 %v668, 16
        %v683 = vadd.s32 %v675, 16
        %v684 = vsel %vm680, %v682, %v668
        %v685 = vsel %vm681, %v683, %v675
        %v686 = vpack.c.bf16 %v656, %v653
        %vm687 = vcmp.ge.s32.totalorder %v684, 1
        %vm688 = vcmp.ge.s32.totalorder %v685, 1
        %v690 = vrot.slane %v656, 7
        %vm693 = vcmask 1040384
        %v694 = vrot.slane %v653, 7
        %v695 = vsel %vm693, %v694, %v690
        %v698 = vsel %vm693, %v690, %v694
        %v699 = vsel %vm687, 1, 0
        %v700 = vsel %vm688, 1, 0
        %vm701 = vcmp.eq.s32.totalorder %v699, 1
        %vm702 = vcmp.eq.s32.totalorder %v700, 1
        %v703 = vsel %vm701, %v698, 0.0
        %v704 = vsel %vm702, %v695, 0.0
        %v705 = vpack.c.bf16 %v704, %v703
        %vm706 = vcmp.lt.s32.totalorder %v684, 15
        %vm707 = vcmp.lt.s32.totalorder %v685, 15
        %vm708 = vcmask 1046528
        %v709 = vrot.slane %v653, 1
        %v710 = vrot.slane %v656, 1
        %v711 = vsel %vm708, %v709, %v710
        %v715 = vsel %vm708, %v710, %v709
        %v716 = vsel %vm706, 1, 0
        %v717 = vsel %vm707, 1, 0
        %vm718 = vcmp.eq.s32.totalorder %v716, 1
        %vm719 = vcmp.eq.s32.totalorder %v717, 1
        %v720 = vsel %vm718, %v711, 0.0
        %v721 = vsel %vm719, %v715, 0.0
        %v722 = vpack.c.bf16 %v721, %v720
        %724 = vrot.lane.b32.xlu0 %v686, 64
        %v725 = vpop.permute.xlu0 %724
        %vm726 = vcmask 523264
        %v729 = vsel %vm726, %v705, %v725
        %v731 = vld [vmem:[%s3] sm:$0xff]
        %v732 = vld [vmem:[%s3 + $0x8] sm:$0xff]
        %v733 = vld [vmem:[%s3 + $0x10] sm:$0xff]
        %v734 = vld [vmem:[%s3 + $0x18] sm:$0xff]
        %v735 = vld [vmem:[%s3 + $0x20] sm:$0xff]
        %v736 = vld [vmem:[%s3 + $0x28] sm:$0xff]
        %v737 = vld [vmem:[%s3 + $0x30] sm:$0xff]
        %v738 = vld [vmem:[%s3 + $0x38] sm:$0xff]
        %v739 = vld [vmem:[%s3 + $0x40] sm:$0xff]
        %v740 = vld [vmem:[%s3 + $0x48] sm:$0xff]
        %v741 = vld [vmem:[%s3 + $0x50] sm:$0xff]
        %v742 = vld [vmem:[%s3 + $0x58] sm:$0xff]
        %v743 = vld [vmem:[%s3 + $0x60] sm:$0xff]
        %v744 = vld [vmem:[%s3 + $0x68] sm:$0xff]
        %v745 = vld [vmem:[%s3 + $0x70] sm:$0xff]
        %v746 = vld [vmem:[%s3 + $0x78] sm:$0xff]
        %v747 = vld [vmem:[%s3 + $0x80] sm:$0xff]
        %v748 = vld [vmem:[%s3 + $0x88] sm:$0xff]
        %v749 = vld [vmem:[%s3 + $0x90] sm:$0xff]
        %v750 = vld [vmem:[%s3 + $0x98] sm:$0xff]
        %v751 = vld [vmem:[%s3 + $0xa0] sm:$0xff]
        %v752 = vld [vmem:[%s3 + $0xa8] sm:$0xff]
        %v753 = vld [vmem:[%s3 + $0xb0] sm:$0xff]
        %v754 = vld [vmem:[%s3 + $0xb8] sm:$0xff]
        %v755 = vld [vmem:[#allocation4] sm:$0x3]
        %v757 = vlaneseq
        %v758 = vshrl.u32 %v757, 7
        %v759 = vsub.s32 0, %v758
        %v760 = vrot.slane %v755, %v759
        %v761 = vlaneseq
        %v762 = vshrl.u32 %v761, 7
        %v763 = vsub.s32 1, %v762
        %v764 = vrot.slane %v755, %v763
        %v791 = vunpack.c.l.b16 %v731
        %v792 = vunpack.c.h.b16 %v731
        %v793 = vunpack.c.l.b16 %v732
        %v794 = vunpack.c.h.b16 %v732
        %v795 = vunpack.c.l.b16 %v733
        %v796 = vunpack.c.h.b16 %v733
        %v797 = vunpack.c.l.b16 %v734
        %v798 = vunpack.c.h.b16 %v734
        %v799 = vunpack.c.l.b16 %v735
        %v800 = vunpack.c.h.b16 %v735
        %v801 = vunpack.c.l.b16 %v736
        %v802 = vunpack.c.h.b16 %v736
        %v803 = vunpack.c.l.b16 %v737
        %v804 = vunpack.c.h.b16 %v737
        %v805 = vunpack.c.l.b16 %v738
        %v806 = vunpack.c.h.b16 %v738
        %v807 = vunpack.c.l.b16 %v739
        %v808 = vunpack.c.h.b16 %v739
        %v809 = vunpack.c.l.b16 %v740
        %v810 = vunpack.c.h.b16 %v740
        %v811 = vunpack.c.l.b16 %v741
        %v812 = vunpack.c.h.b16 %v741
        %v813 = vunpack.c.l.b16 %v742
        %v814 = vunpack.c.h.b16 %v742
        %v815 = vunpack.c.l.b16 %v743
        %v816 = vunpack.c.h.b16 %v743
        %v817 = vunpack.c.l.b16 %v744
        %v818 = vunpack.c.h.b16 %v744
        %v819 = vunpack.c.l.b16 %v745
        %v820 = vunpack.c.h.b16 %v745
        %v821 = vunpack.c.l.b16 %v746
        %v822 = vunpack.c.h.b16 %v746
        %v823 = vunpack.c.l.b16 %v747
        %v824 = vunpack.c.h.b16 %v747
        %v825 = vunpack.c.l.b16 %v748
        %v826 = vunpack.c.h.b16 %v748
        %v827 = vunpack.c.l.b16 %v749
        %v828 = vunpack.c.h.b16 %v749
        %v829 = vunpack.c.l.b16 %v750
        %v830 = vunpack.c.h.b16 %v750
        %v831 = vunpack.c.l.b16 %v751
        %v832 = vunpack.c.h.b16 %v751
        %v833 = vunpack.c.l.b16 %v752
        %v834 = vunpack.c.h.b16 %v752
        %v835 = vunpack.c.l.b16 %v753
        %v836 = vunpack.c.h.b16 %v753
        %v837 = vunpack.c.l.b16 %v754
        %v838 = vunpack.c.h.b16 %v754
        %v839 = vpack.c.b16 %v793, %v791
        %v840 = vpack.c.b16 %v794, %v792
        %v841 = vpack.c.b16 %v797, %v795
        %v842 = vpack.c.b16 %v798, %v796
        %v843 = vpack.c.b16 %v801, %v799
        %v844 = vpack.c.b16 %v802, %v800
        %v845 = vpack.c.b16 %v805, %v803
        %v846 = vpack.c.b16 %v806, %v804
        %v847 = vpack.c.b16 %v809, %v807
        %v848 = vpack.c.b16 %v810, %v808
        %v849 = vpack.c.b16 %v813, %v811
        %v850 = vpack.c.b16 %v814, %v812
        %v851 = vpack.c.b16 %v817, %v815
        %v852 = vpack.c.b16 %v818, %v816
        %v853 = vpack.c.b16 %v821, %v819
        %v854 = vpack.c.b16 %v822, %v820
        %v855 = vpack.c.b16 %v825, %v823
        %v856 = vpack.c.b16 %v826, %v824
        %v857 = vpack.c.b16 %v829, %v827
        %v858 = vpack.c.b16 %v830, %v828
        %v859 = vpack.c.b16 %v833, %v831
        %v860 = vpack.c.b16 %v834, %v832
        %v861 = vpack.c.b16 %v837, %v835
        %v862 = vpack.c.b16 %v838, %v836
        %v888 = vsel %vm726, %v722, 0
        %890 = vmatprep.subr.bf16.mxu0 %v840
        %891 = vmatpush1.bf16.msra.mxu0 %v839
        %892 = vmatprep.subr.bf16.mxu0 %v842
        %893 = vmatpush1.bf16.msra.mxu0 %v841
        %894 = vmatprep.subr.bf16.mxu0 %v844
        %895 = vmatpush1.bf16.msra.mxu0 %v843
        %896 = vmatprep.subr.bf16.mxu0 %v846
        %897 = vmatpush1.bf16.msra.mxu0 %v845
        %898 = vmatprep.subr.bf16.mxu0 %v848
        %899 = vmatpush1.bf16.msra.mxu0 %v847
        %900 = vmatprep.subr.bf16.mxu0 %v850
        %901 = vmatpush1.bf16.msra.mxu0 %v849
        %902 = vmatprep.subr.bf16.mxu0 %v852
        %903 = vmatpush1.bf16.msra.mxu0 %v851
        %904 = vmatprep.subr.bf16.mxu0 %v854
        %905 = vmatpush1.bf16.msra.mxu0 %v853
        %906 = vmatprep.subr.bf16.mxu0 %v856
        %907 = vmatpush1.bf16.msra.mxu0 %v855
        %908 = vmatprep.subr.bf16.mxu0 %v858
        %909 = vmatpush1.bf16.msra.mxu0 %v857
        %910 = vmatprep.subr.bf16.mxu0 %v860
        %911 = vmatpush1.bf16.msra.mxu0 %v859
        %912 = vmatprep.subr.bf16.mxu0 %v862
        %913 = vmatpush1.bf16.msra.mxu0 %v861
        %914 = vmatprep.subr.bf16.mxu0 0
        %915 = vmatpush1.bf16.msra.mxu0 0
        %916 = vmatprep.subr.bf16.mxu0 0
        %917 = vmatpush1.bf16.msra.mxu0 0
        %918 = vmatprep.subr.bf16.mxu0 0
        %919 = vmatpush1.bf16.msra.mxu0 0
        %920 = vmatprep.subr.bf16.mxu0 0
        %921 = vmatpush1.bf16.msra.mxu0 0
        %922 = vmatprep.mubr.bf16.mxu0 %v888
        %923 = vmatmul.mubr.bf16.gmra.mrb[0].mxu0 %v729
        %v924 = vpop.f32.mrb[0].mxu0
        %v925 = vadd.f32 %v760, %v924
        %v926 = vpop.f32.mrb[0].mxu0
        %v927 = vadd.f32 %v764, %v926
        %v928 = vpop.f32.mrb[0].mxu0
        %v929 = vadd.f32 %v760, %v928
        %v930 = vpop.f32.mrb[0].mxu0
        %v931 = vadd.f32 %v764, %v930
        %932 = vdwg.mxu0
        %v933 = vtanh.pop %v925
        %v934 = vtanh.pop %v929
        %v935 = vmul.f32 %v927, 0.5
        %v936 = vmul.f32 %v931, 0.5
        %v937 = vtanh.pop %v935
        %v938 = vtanh.pop %v936
        %v939 = vmul.f32 %v937, 0.5
        %v940 = vmul.f32 %v938, 0.5
        %v941 = vadd.f32 %v939, 0.5
        %v942 = vadd.f32 %v940, 0.5
        %v943 = vmul.f32 %v933, %v941
        %v944 = vmul.f32 %v934, %v942
        %v945 = vpack.c.bf16 %v944, %v943
        %v946 = vld [vmem:[%s5] sm:$0xf]
        %v947 = vld [vmem:[%s5 + $0x4] sm:$0xf]
        %v948 = vld [vmem:[%s5 + $0x8] sm:$0xf]
        %v949 = vld [vmem:[%s5 + $0xc] sm:$0xf]
        %v950 = vld [vmem:[%s5 + $0x10] sm:$0xf]
        %v951 = vld [vmem:[%s5 + $0x14] sm:$0xf]
        %v952 = vld [vmem:[%s5 + $0x18] sm:$0xf]
        %v953 = vld [vmem:[%s5 + $0x1c] sm:$0xf]
        %v954 = vld [vmem:[%s5 + $0x20] sm:$0xf]
        %v955 = vld [vmem:[%s5 + $0x24] sm:$0xf]
        %v956 = vld [vmem:[%s5 + $0x28] sm:$0xf]
        %v957 = vld [vmem:[%s5 + $0x2c] sm:$0xf]
        %v958 = vld [vmem:[%s5 + $0x30] sm:$0xf]
        %v959 = vld [vmem:[%s5 + $0x34] sm:$0xf]
        %v960 = vld [vmem:[%s5 + $0x38] sm:$0xf]
        %v961 = vld [vmem:[%s5 + $0x3c] sm:$0xf]
        %v978 = vunpack.c.l.b16 %v946
        %v979 = vunpack.c.l.b16 %v947
        %v980 = vunpack.c.l.b16 %v948
        %v981 = vunpack.c.l.b16 %v949
        %v982 = vunpack.c.l.b16 %v950
        %v983 = vunpack.c.l.b16 %v951
        %v984 = vunpack.c.l.b16 %v952
        %v985 = vunpack.c.l.b16 %v953
        %v986 = vunpack.c.l.b16 %v954
        %v987 = vunpack.c.l.b16 %v955
        %v988 = vunpack.c.l.b16 %v956
        %v989 = vunpack.c.l.b16 %v957
        %v990 = vunpack.c.l.b16 %v958
        %v991 = vunpack.c.l.b16 %v959
        %v992 = vunpack.c.l.b16 %v960
        %v993 = vunpack.c.l.b16 %v961
        %v994 = vpack.c.b16 %v979, %v978
        %v995 = vpack.c.b16 %v981, %v980
        %v996 = vpack.c.b16 %v983, %v982
        %v997 = vpack.c.b16 %v985, %v984
        %v998 = vpack.c.b16 %v987, %v986
        %v999 = vpack.c.b16 %v989, %v988
        %v1000 = vpack.c.b16 %v991, %v990
        %v1001 = vpack.c.b16 %v993, %v992
        %1010 = vmatprep.subr.bf16.mxu0 0
        %1011 = vmatpush1.bf16.msra.mxu0 %v994
        %1012 = vmatprep.subr.bf16.mxu0 0
        %1013 = vmatpush1.bf16.msra.mxu0 %v995
        %1014 = vmatprep.subr.bf16.mxu0 0
        %1015 = vmatpush1.bf16.msra.mxu0 %v996
        %1016 = vmatprep.subr.bf16.mxu0 0
        %1017 = vmatpush1.bf16.msra.mxu0 %v997
        %1018 = vmatprep.subr.bf16.mxu0 0
        %1019 = vmatpush1.bf16.msra.mxu0 %v998
        %1020 = vmatprep.subr.bf16.mxu0 0
        %1021 = vmatpush1.bf16.msra.mxu0 %v999
        %1022 = vmatprep.subr.bf16.mxu0 0
        %1023 = vmatpush1.bf16.msra.mxu0 %v1000
        %1024 = vmatprep.subr.bf16.mxu0 0
        %1025 = vmatpush1.bf16.msra.mxu0 %v1001
        %1026 = vmatprep.subr.bf16.mxu0 0
        %1027 = vmatpush1.bf16.msra.mxu0 0
        %1028 = vmatprep.subr.bf16.mxu0 0
        %1029 = vmatpush1.bf16.msra.mxu0 0
        %1030 = vmatprep.subr.bf16.mxu0 0
        %1031 = vmatpush1.bf16.msra.mxu0 0
        %1032 = vmatprep.subr.bf16.mxu0 0
        %1033 = vmatpush1.bf16.msra.mxu0 0
        %1034 = vmatprep.subr.bf16.mxu0 0
        %1035 = vmatpush1.bf16.msra.mxu0 0
        %1036 = vmatprep.subr.bf16.mxu0 0
        %1037 = vmatpush1.bf16.msra.mxu0 0
        %1038 = vmatprep.subr.bf16.mxu0 0
        %1039 = vmatpush1.bf16.msra.mxu0 0
        %1040 = vmatprep.subr.bf16.mxu0 0
        %1041 = vmatpush1.bf16.msra.mxu0 0
        %1042 = vmatprep.mubr.bf16.mxu0 0
        %1043 = vmatmul.mubr.bf16.gmra.mrb[0].mxu0 %v945
        %v1044 = vpop.f32.mrb[0].mxu0
        %v1045 = vadd.f32 0.0, %v1044
        %v1046 = vpop.f32.mrb[0].mxu0
        %v1047 = vpop.f32.mrb[0].mxu0
        %v1048 = vadd.f32 0.0, %v1047
        %v1049 = vpop.f32.mrb[0].mxu0
        %1050 = vdwg.mxu0
        %v1051 = vadd.f32 %v653, %v1045
        %v1052 = vadd.f32 %v656, %v1048
        %v1053 = vld [vmem:[#allocation6] sm:$0x1]
        %v1055 = vlaneseq
        %v1056 = vshrl.u32 %v1055, 7
        %v1057 = vsub.s32 0, %v1056
        %v1058 = vrot.slane %v1053, %v1057
        %v1060 = vadd.f32 %v1051, %v1058
        %v1061 = vadd.f32 %v1052, %v1058
        %v1062 = vpack.c.bf16 %v1061, %v1060
        %vm1063 = vcmp.ge.s32.totalorder %v684, 2
        %vm1064 = vcmp.ge.s32.totalorder %v685, 2
        %v1066 = vrot.slane %v1061, 6
        %vm1069 = vcmask 1041408
        %v1070 = vrot.slane %v1060, 6
        %v1071 = vsel %vm1069, %v1070, %v1066
        %v1074 = vsel %vm1069, %v1066, %v1070
        %v1075 = vsel %vm1063, 1, 0
        %v1076 = vsel %vm1064, 1, 0
        %vm1077 = vcmp.eq.s32.totalorder %v1075, 1
        %vm1078 = vcmp.eq.s32.totalorder %v1076, 1
        %v1079 = vsel %vm1077, %v1074, 0.0
        %v1080 = vsel %vm1078, %v1071, 0.0
        %v1081 = vpack.c.bf16 %v1080, %v1079
        %vm1082 = vcmp.lt.s32.totalorder %v684, 14
        %vm1083 = vcmp.lt.s32.totalorder %v685, 14
        %vm1084 = vcmask 1045504
        %v1085 = vrot.slane %v1060, 2
        %v1086 = vrot.slane %v1061, 2
        %v1087 = vsel %vm1084, %v1085, %v1086
        %v1091 = vsel %vm1084, %v1086, %v1085
        %v1092 = vsel %vm1082, 1, 0
        %v1093 = vsel %vm1083, 1, 0
        %vm1094 = vcmp.eq.s32.totalorder %v1092, 1
        %vm1095 = vcmp.eq.s32.totalorder %v1093, 1
        %v1096 = vsel %vm1094, %v1087, 0.0
        %v1097 = vsel %vm1095, %v1091, 0.0
        %v1098 = vpack.c.bf16 %v1097, %v1096
        %1100 = vrot.lane.b32.xlu0 %v1062, 64
        %v1101 = vpop.permute.xlu0 %1100
        %v1104 = vsel %vm726, %v1081, %v1101
        %v1106 = vld [vmem:[%s7] sm:$0xff]
        %v1107 = vld [vmem:[%s7 + $0x8] sm:$0xff]
        %v1108 = vld [vmem:[%s7 + $0x10] sm:$0xff]
        %v1109 = vld [vmem:[%s7 + $0x18] sm:$0xff]
        %v1110 = vld [vmem:[%s7 + $0x20] sm:$0xff]
        %v1111 = vld [vmem:[%s7 + $0x28] sm:$0xff]
        %v1112 = vld [vmem:[%s7 + $0x30] sm:$0xff]
        %v1113 = vld [vmem:[%s7 + $0x38] sm:$0xff]
        %v1114 = vld [vmem:[%s7 + $0x40] sm:$0xff]
        %v1115 = vld [vmem:[%s7 + $0x48] sm:$0xff]
        %v1116 = vld [vmem:[%s7 + $0x50] sm:$0xff]
        %v1117 = vld [vmem:[%s7 + $0x58] sm:$0xff]
        %v1118 = vld [vmem:[%s7 + $0x60] sm:$0xff]
        %v1119 = vld [vmem:[%s7 + $0x68] sm:$0xff]
        %v1120 = vld [vmem:[%s7 + $0x70] sm:$0xff]
        %v1121 = vld [vmem:[%s7 + $0x78] sm:$0xff]
        %v1122 = vld [vmem:[%s7 + $0x80] sm:$0xff]
        %v1123 = vld [vmem:[%s7 + $0x88] sm:$0xff]
        %v1124 = vld [vmem:[%s7 + $0x90] sm:$0xff]
        %v1125 = vld [vmem:[%s7 + $0x98] sm:$0xff]
        %v1126 = vld [vmem:[%s7 + $0xa0] sm:$0xff]
        %v1127 = vld [vmem:[%s7 + $0xa8] sm:$0xff]
        %v1128 = vld [vmem:[%s7 + $0xb0] sm:$0xff]
        %v1129 = vld [vmem:[%s7 + $0xb8] sm:$0xff]
        %v1130 = vld [vmem:[#allocation7] sm:$0x3]
        %v1132 = vlaneseq
        %v1133 = vshrl.u32 %v1132, 7
        %v1134 = vsub.s32 0, %v1133
        %v1135 = vrot.slane %v1130, %v1134
        %v1136 = vlaneseq
        %v1137 = vshrl.u32 %v1136, 7
        %v1138 = vsub.s32 1, %v1137
        %v1139 = vrot.slane %v1130, %v1138
        %v1166 = vunpack.c.l.b16 %v1106
        %v1167 = vunpack.c.h.b16 %v1106
        %v1168 = vunpack.c.l.b16 %v1107
        %v1169 = vunpack.c.h.b16 %v1107
        %v1170 = vunpack.c.l.b16 %v1108
        %v1171 = vunpack.c.h.b16 %v1108
        %v1172 = vunpack.c.l.b16 %v1109
        %v1173 = vunpack.c.h.b16 %v1109
        %v1174 = vunpack.c.l.b16 %v1110
        %v1175 = vunpack.c.h.b16 %v1110
        %v1176 = vunpack.c.l.b16 %v1111
        %v1177 = vunpack.c.h.b16 %v1111
        %v1178 = vunpack.c.l.b16 %v1112
        %v1179 = vunpack.c.h.b16 %v1112
        %v1180 = vunpack.c.l.b16 %v1113
        %v1181 = vunpack.c.h.b16 %v1113
        %v1182 = vunpack.c.l.b16 %v1114
        %v1183 = vunpack.c.h.b16 %v1114
        %v1184 = vunpack.c.l.b16 %v1115
        %v1185 = vunpack.c.h.b16 %v1115
        %v1186 = vunpack.c.l.b16 %v1116
        %v1187 = vunpack.c.h.b16 %v1116
        %v1188 = vunpack.c.l.b16 %v1117
        %v1189 = vunpack.c.h.b16 %v1117
        %v1190 = vunpack.c.l.b16 %v1118
        %v1191 = vunpack.c.h.b16 %v1118
        %v1192 = vunpack.c.l.b16 %v1119
        %v1193 = vunpack.c.h.b16 %v1119
        %v1194 = vunpack.c.l.b16 %v1120
        %v1195 = vunpack.c.h.b16 %v1120
        %v1196 = vunpack.c.l.b16 %v1121
        %v1197 = vunpack.c.h.b16 %v1121
        %v1198 = vunpack.c.l.b16 %v1122
        %v1199 = vunpack.c.h.b16 %v1122
        %v1200 = vunpack.c.l.b16 %v1123
        %v1201 = vunpack.c.h.b16 %v1123
        %v1202 = vunpack.c.l.b16 %v1124
        %v1203 = vunpack.c.h.b16 %v1124
        %v1204 = vunpack.c.l.b16 %v1125
        %v1205 = vunpack.c.h.b16 %v1125
        %v1206 = vunpack.c.l.b16 %v1126
        %v1207 = vunpack.c.h.b16 %v1126
        %v1208 = vunpack.c.l.b16 %v1127
        %v1209 = vunpack.c.h.b16 %v1127
        %v1210 = vunpack.c.l.b16 %v1128
        %v1211 = vunpack.c.h.b16 %v1128
        %v1212 = vunpack.c.l.b16 %v1129
        %v1213 = vunpack.c.h.b16 %v1129
        %v1214 = vpack.c.b16 %v1168, %v1166
        %v1215 = vpack.c.b16 %v1169, %v1167
        %v1216 = vpack.c.b16 %v1172, %v1170
        %v1217 = vpack.c.b16 %v1173, %v1171
        %v1218 = vpack.c.b16 %v1176, %v1174
        %v1219 = vpack.c.b16 %v1177, %v1175
        %v1220 = vpack.c.b16 %v1180, %v1178
        %v1221 = vpack.c.b16 %v1181, %v1179
        %v1222 = vpack.c.b16 %v1184, %v1182
        %v1223 = vpack.c.b16 %v1185, %v1183
        %v1224 = vpack.c.b16 %v1188, %v1186
        %v1225 = vpack.c.b16 %v1189, %v1187
        %v1226 = vpack.c.b16 %v1192, %v1190
        %v1227 = vpack.c.b16 %v1193, %v1191
        %v1228 = vpack.c.b16 %v1196, %v1194
        %v1229 = vpack.c.b16 %v1197, %v1195
        %v1230 = vpack.c.b16 %v1200, %v1198
        %v1231 = vpack.c.b16 %v1201, %v1199
        %v1232 = vpack.c.b16 %v1204, %v1202
        %v1233 = vpack.c.b16 %v1205, %v1203
        %v1234 = vpack.c.b16 %v1208, %v1206
        %v1235 = vpack.c.b16 %v1209, %v1207
        %v1236 = vpack.c.b16 %v1212, %v1210
        %v1237 = vpack.c.b16 %v1213, %v1211
        %v1263 = vsel %vm726, %v1098, 0
        %1265 = vmatprep.subr.bf16.mxu0 %v1215
        %1266 = vmatpush1.bf16.msra.mxu0 %v1214
        %1267 = vmatprep.subr.bf16.mxu0 %v1217
        %1268 = vmatpush1.bf16.msra.mxu0 %v1216
        %1269 = vmatprep.subr.bf16.mxu0 %v1219
        %1270 = vmatpush1.bf16.msra.mxu0 %v1218
        %1271 = vmatprep.subr.bf16.mxu0 %v1221
        %1272 = vmatpush1.bf16.msra.mxu0 %v1220
        %1273 = vmatprep.subr.bf16.mxu0 %v1223
        %1274 = vmatpush1.bf16.msra.mxu0 %v1222
        %1275 = vmatprep.subr.bf16.mxu0 %v1225
        %1276 = vmatpush1.bf16.msra.mxu0 %v1224
        %1277 = vmatprep.subr.bf16.mxu0 %v1227
        %1278 = vmatpush1.bf16.msra.mxu0 %v1226
        %1279 = vmatprep.subr.bf16.mxu0 %v1229
        %1280 = vmatpush1.bf16.msra.mxu0 %v1228
        %1281 = vmatprep.subr.bf16.mxu0 %v1231
        %1282 = vmatpush1.bf16.msra.mxu0 %v1230
        %1283 = vmatprep.subr.bf16.mxu0 %v1233
        %1284 = vmatpush1.bf16.msra.mxu0 %v1232
        %1285 = vmatprep.subr.bf16.mxu0 %v1235
        %1286 = vmatpush1.bf16.msra.mxu0 %v1234
        %1287 = vmatprep.subr.bf16.mxu0 %v1237
        %1288 = vmatpush1.bf16.msra.mxu0 %v1236
        %1289 = vmatprep.subr.bf16.mxu0 0
        %1290 = vmatpush1.bf16.msra.mxu0 0
        %1291 = vmatprep.subr.bf16.mxu0 0
        %1292 = vmatpush1.bf16.msra.mxu0 0
        %1293 = vmatprep.subr.bf16.mxu0 0
        %1294 = vmatpush1.bf16.msra.mxu0 0
        %1295 = vmatprep.subr.bf16.mxu0 0
        %1296 = vmatpush1.bf16.msra.mxu0 0
        %1297 = vmatprep.mubr.bf16.mxu0 %v1263
        %1298 = vmatmul.mubr.bf16.gmra.mrb[0].mxu0 %v1104
        %v1299 = vpop.f32.mrb[0].mxu0
        %v1300 = vadd.f32 %v1135, %v1299
        %v1301 = vpop.f32.mrb[0].mxu0
        %v1302 = vadd.f32 %v1139, %v1301
        %v1303 = vpop.f32.mrb[0].mxu0
        %v1304 = vadd.f32 %v1135, %v1303
        %v1305 = vpop.f32.mrb[0].mxu0
        %v1306 = vadd.f32 %v1139, %v1305
        %1307 = vdwg.mxu0
        %v1308 = vtanh.pop %v1300
        %v1309 = vtanh.pop %v1304
        %v1310 = vmul.f32 %v1302, 0.5
        %v1311 = vmul.f32 %v1306, 0.5
        %v1312 = vtanh.pop %v1310
        %v1313 = vtanh.pop %v1311
        %v1314 = vmul.f32 %v1312, 0.5
        %v1315 = vmul.f32 %v1313, 0.5
        %v1316 = vadd.f32 %v1314, 0.5
        %v1317 = vadd.f32 %v1315, 0.5
        %v1318 = vmul.f32 %v1308, %v1316
        %v1319 = vmul.f32 %v1309, %v1317
        %v1320 = vpack.c.bf16 %v1319, %v1318
        %v1321 = vld [vmem:[%s9] sm:$0xf]
        %v1322 = vld [vmem:[%s9 + $0x4] sm:$0xf]
        %v1323 = vld [vmem:[%s9 + $0x8] sm:$0xf]
        %v1324 = vld [vmem:[%s9 + $0xc] sm:$0xf]
        %v1325 = vld [vmem:[%s9 + $0x10] sm:$0xf]
        %v1326 = vld [vmem:[%s9 + $0x14] sm:$0xf]
        %v1327 = vld [vmem:[%s9 + $0x18] sm:$0xf]
        %v1328 = vld [vmem:[%s9 + $0x1c] sm:$0xf]
        %v1329 = vld [vmem:[%s9 + $0x20] sm:$0xf]
        %v1330 = vld [vmem:[%s9 + $0x24] sm:$0xf]
        %v1331 = vld [vmem:[%s9 + $0x28] sm:$0xf]
        %v1332 = vld [vmem:[%s9 + $0x2c] sm:$0xf]
        %v1333 = vld [vmem:[%s9 + $0x30] sm:$0xf]
        %v1334 = vld [vmem:[%s9 + $0x34] sm:$0xf]
        %v1335 = vld [vmem:[%s9 + $0x38] sm:$0xf]
        %v1336 = vld [vmem:[%s9 + $0x3c] sm:$0xf]
        %v1353 = vunpack.c.l.b16 %v1321
        %v1354 = vunpack.c.l.b16 %v1322
        %v1355 = vunpack.c.l.b16 %v1323
        %v1356 = vunpack.c.l.b16 %v1324
        %v1357 = vunpack.c.l.b16 %v1325
        %v1358 = vunpack.c.l.b16 %v1326
        %v1359 = vunpack.c.l.b16 %v1327
        %v1360 = vunpack.c.l.b16 %v1328
        %v1361 = vunpack.c.l.b16 %v1329
        %v1362 = vunpack.c.l.b16 %v1330
        %v1363 = vunpack.c.l.b16 %v1331
        %v1364 = vunpack.c.l.b16 %v1332
        %v1365 = vunpack.c.l.b16 %v1333
        %v1366 = vunpack.c.l.b16 %v1334
        %v1367 = vunpack.c.l.b16 %v1335
        %v1368 = vunpack.c.l.b16 %v1336
        %v1369 = vpack.c.b16 %v1354, %v1353
        %v1370 = vpack.c.b16 %v1356, %v1355
        %v1371 = vpack.c.b16 %v1358, %v1357
        %v1372 = vpack.c.b16 %v1360, %v1359
        %v1373 = vpack.c.b16 %v1362, %v1361
        %v1374 = vpack.c.b16 %v1364, %v1363
        %v1375 = vpack.c.b16 %v1366, %v1365
        %v1376 = vpack.c.b16 %v1368, %v1367
        %1385 = vmatprep.subr.bf16.mxu0 0
        %1386 = vmatpush1.bf16.msra.mxu0 %v1369
        %1387 = vmatprep.subr.bf16.mxu0 0
        %1388 = vmatpush1.bf16.msra.mxu0 %v1370
        %1389 = vmatprep.subr.bf16.mxu0 0
        %1390 = vmatpush1.bf16.msra.mxu0 %v1371
        %1391 = vmatprep.subr.bf16.mxu0 0
        %1392 = vmatpush1.bf16.msra.mxu0 %v1372
        %1393 = vmatprep.subr.bf16.mxu0 0
        %1394 = vmatpush1.bf16.msra.mxu0 %v1373
        %1395 = vmatprep.subr.bf16.mxu0 0
        %1396 = vmatpush1.bf16.msra.mxu0 %v1374
        %1397 = vmatprep.subr.bf16.mxu0 0
        %1398 = vmatpush1.bf16.msra.mxu0 %v1375
        %1399 = vmatprep.subr.bf16.mxu0 0
        %1400 = vmatpush1.bf16.msra.mxu0 %v1376
        %1401 = vmatprep.subr.bf16.mxu0 0
        %1402 = vmatpush1.bf16.msra.mxu0 0
        %1403 = vmatprep.subr.bf16.mxu0 0
        %1404 = vmatpush1.bf16.msra.mxu0 0
        %1405 = vmatprep.subr.bf16.mxu0 0
        %1406 = vmatpush1.bf16.msra.mxu0 0
        %1407 = vmatprep.subr.bf16.mxu0 0
        %1408 = vmatpush1.bf16.msra.mxu0 0
        %1409 = vmatprep.subr.bf16.mxu0 0
        %1410 = vmatpush1.bf16.msra.mxu0 0
        %1411 = vmatprep.subr.bf16.mxu0 0
        %1412 = vmatpush1.bf16.msra.mxu0 0
        %1413 = vmatprep.subr.bf16.mxu0 0
        %1414 = vmatpush1.bf16.msra.mxu0 0
        %1415 = vmatprep.subr.bf16.mxu0 0
        %1416 = vmatpush1.bf16.msra.mxu0 0
        %1417 = vmatprep.mubr.bf16.mxu0 0
        %1418 = vmatmul.mubr.bf16.gmra.mrb[0].mxu0 %v1320
        %v1419 = vpop.f32.mrb[0].mxu0
        %v1420 = vadd.f32 0.0, %v1419
        %v1421 = vpop.f32.mrb[0].mxu0
        %v1422 = vpop.f32.mrb[0].mxu0
        %v1423 = vadd.f32 0.0, %v1422
        %v1424 = vpop.f32.mrb[0].mxu0
        %1425 = vdwg.mxu0
        %v1426 = vadd.f32 %v1060, %v1420
        %v1427 = vadd.f32 %v1061, %v1423
        %v1428 = vld [vmem:[#allocation9] sm:$0x1]
        %v1430 = vlaneseq
        %v1431 = vshrl.u32 %v1430, 7
        %v1432 = vsub.s32 0, %v1431
        %v1433 = vrot.slane %v1428, %v1432
        %v1435 = vadd.f32 %v1426, %v1433
        %v1436 = vadd.f32 %v1427, %v1433
        %v1437 = vpack.c.bf16 %v1436, %v1435
        %vm1438 = vcmp.ge.s32.totalorder %v684, 4
        %vm1439 = vcmp.ge.s32.totalorder %v685, 4
        %v1441 = vrot.slane %v1436, 4
        %v1444 = vrot.slane %v1435, 4
        %v1445 = vsel %vm614, %v1444, %v1441
        %v1448 = vsel %vm614, %v1441, %v1444
        %v1449 = vsel %vm1438, 1, 0
        %v1450 = vsel %vm1439, 1, 0
        %vm1451 = vcmp.eq.s32.totalorder %v1449, 1
        %vm1452 = vcmp.eq.s32.totalorder %v1450, 1
        %v1453 = vsel %vm1451, %v1448, 0.0
        %v1454 = vsel %vm1452, %v1445, 0.0
        %v1455 = vpack.c.bf16 %v1454, %v1453
        %vm1456 = vcmp.lt.s32.totalorder %v684, 12
        %vm1457 = vcmp.lt.s32.totalorder %v685, 12
        %v1458 = vsel %vm1456, 1, 0
        %v1459 = vsel %vm1457, 1, 0
        %vm1460 = vcmp.eq.s32.totalorder %v1458, 1
        %vm1461 = vcmp.eq.s32.totalorder %v1459, 1
        %v1462 = vsel %vm1460, %v1445, 0.0
        %v1463 = vsel %vm1461, %v1448, 0.0
        %v1464 = vpack.c.bf16 %v1463, %v1462
        %1466 = vrot.lane.b32.xlu0 %v1437, 64
        %v1467 = vpop.permute.xlu0 %1466
        %v1470 = vsel %vm726, %v1455, %v1467
        %v1472 = vld [vmem:[#allocation10] sm:$0xff]
        %v1473 = vld [vmem:[#allocation10 + $0x8] sm:$0xff]
        %v1474 = vld [vmem:[#allocation10 + $0x10] sm:$0xff]
        %v1475 = vld [vmem:[#allocation10 + $0x18] sm:$0xff]
        %v1476 = vld [vmem:[#allocation10 + $0x20] sm:$0xff]
        %v1477 = vld [vmem:[#allocation10 + $0x28] sm:$0xff]
        %v1478 = vld [vmem:[#allocation10 + $0x30] sm:$0xff]
        %v1479 = vld [vmem:[#allocation10 + $0x38] sm:$0xff]
        %v1480 = vld [vmem:[#allocation10 + $0x40] sm:$0xff]
        %v1481 = vld [vmem:[#allocation10 + $0x48] sm:$0xff]
        %v1482 = vld [vmem:[#allocation10 + $0x50] sm:$0xff]
        %v1483 = vld [vmem:[#allocation10 + $0x58] sm:$0xff]
        %v1484 = vld [vmem:[#allocation10 + $0x60] sm:$0xff]
        %v1485 = vld [vmem:[#allocation10 + $0x68] sm:$0xff]
        %v1486 = vld [vmem:[#allocation10 + $0x70] sm:$0xff]
        %v1487 = vld [vmem:[#allocation10 + $0x78] sm:$0xff]
        %v1488 = vld [vmem:[#allocation10 + $0x80] sm:$0xff]
        %v1489 = vld [vmem:[#allocation10 + $0x88] sm:$0xff]
        %v1490 = vld [vmem:[#allocation10 + $0x90] sm:$0xff]
        %v1491 = vld [vmem:[#allocation10 + $0x98] sm:$0xff]
        %v1492 = vld [vmem:[#allocation10 + $0xa0] sm:$0xff]
        %v1493 = vld [vmem:[#allocation10 + $0xa8] sm:$0xff]
        %v1494 = vld [vmem:[#allocation10 + $0xb0] sm:$0xff]
        %v1495 = vld [vmem:[#allocation10 + $0xb8] sm:$0xff]
        %v1496 = vld [vmem:[#allocation12] sm:$0x3]
        %v1498 = vlaneseq
        %v1499 = vshrl.u32 %v1498, 7
        %v1500 = vsub.s32 0, %v1499
        %v1501 = vrot.slane %v1496, %v1500
        %v1502 = vlaneseq
        %v1503 = vshrl.u32 %v1502, 7
        %v1504 = vsub.s32 1, %v1503
        %v1505 = vrot.slane %v1496, %v1504
        %v1532 = vunpack.c.l.b16 %v1472
        %v1533 = vunpack.c.h.b16 %v1472
        %v1534 = vunpack.c.l.b16 %v1473
        %v1535 = vunpack.c.h.b16 %v1473
        %v1536 = vunpack.c.l.b16 %v1474
        %v1537 = vunpack.c.h.b16 %v1474
        %v1538 = vunpack.c.l.b16 %v1475
        %v1539 = vunpack.c.h.b16 %v1475
        %v1540 = vunpack.c.l.b16 %v1476
        %v1541 = vunpack.c.h.b16 %v1476
        %v1542 = vunpack.c.l.b16 %v1477
        %v1543 = vunpack.c.h.b16 %v1477
        %v1544 = vunpack.c.l.b16 %v1478
        %v1545 = vunpack.c.h.b16 %v1478
        %v1546 = vunpack.c.l.b16 %v1479
        %v1547 = vunpack.c.h.b16 %v1479
        %v1548 = vunpack.c.l.b16 %v1480
        %v1549 = vunpack.c.h.b16 %v1480
        %v1550 = vunpack.c.l.b16 %v1481
        %v1551 = vunpack.c.h.b16 %v1481
        %v1552 = vunpack.c.l.b16 %v1482
        %v1553 = vunpack.c.h.b16 %v1482
        %v1554 = vunpack.c.l.b16 %v1483
        %v1555 = vunpack.c.h.b16 %v1483
        %v1556 = vunpack.c.l.b16 %v1484
        %v1557 = vunpack.c.h.b16 %v1484
        %v1558 = vunpack.c.l.b16 %v1485
        %v1559 = vunpack.c.h.b16 %v1485
        %v1560 = vunpack.c.l.b16 %v1486
        %v1561 = vunpack.c.h.b16 %v1486
        %v1562 = vunpack.c.l.b16 %v1487
        %v1563 = vunpack.c.h.b16 %v1487
        %v1564 = vunpack.c.l.b16 %v1488
        %v1565 = vunpack.c.h.b16 %v1488
        %v1566 = vunpack.c.l.b16 %v1489
        %v1567 = vunpack.c.h.b16 %v1489
        %v1568 = vunpack.c.l.b16 %v1490
        %v1569 = vunpack.c.h.b16 %v1490
        %v1570 = vunpack.c.l.b16 %v1491
        %v1571 = vunpack.c.h.b16 %v1491
        %v1572 = vunpack.c.l.b16 %v1492
        %v1573 = vunpack.c.h.b16 %v1492
        %v1574 = vunpack.c.l.b16 %v1493
        %v1575 = vunpack.c.h.b16 %v1493
        %v1576 = vunpack.c.l.b16 %v1494
        %v1577 = vunpack.c.h.b16 %v1494
        %v1578 = vunpack.c.l.b16 %v1495
        %v1579 = vunpack.c.h.b16 %v1495
        %v1580 = vpack.c.b16 %v1534, %v1532
        %v1581 = vpack.c.b16 %v1535, %v1533
        %v1582 = vpack.c.b16 %v1538, %v1536
        %v1583 = vpack.c.b16 %v1539, %v1537
        %v1584 = vpack.c.b16 %v1542, %v1540
        %v1585 = vpack.c.b16 %v1543, %v1541
        %v1586 = vpack.c.b16 %v1546, %v1544
        %v1587 = vpack.c.b16 %v1547, %v1545
        %v1588 = vpack.c.b16 %v1550, %v1548
        %v1589 = vpack.c.b16 %v1551, %v1549
        %v1590 = vpack.c.b16 %v1554, %v1552
        %v1591 = vpack.c.b16 %v1555, %v1553
        %v1592 = vpack.c.b16 %v1558, %v1556
        %v1593 = vpack.c.b16 %v1559, %v1557
        %v1594 = vpack.c.b16 %v1562, %v1560
        %v1595 = vpack.c.b16 %v1563, %v1561
        %v1596 = vpack.c.b16 %v1566, %v1564
        %v1597 = vpack.c.b16 %v1567, %v1565
        %v1598 = vpack.c.b16 %v1570, %v1568
        %v1599 = vpack.c.b16 %v1571, %v1569
        %v1600 = vpack.c.b16 %v1574, %v1572
        %v1601 = vpack.c.b16 %v1575, %v1573
        %v1602 = vpack.c.b16 %v1578, %v1576
        %v1603 = vpack.c.b16 %v1579, %v1577
        %v1629 = vsel %vm726, %v1464, 0
        %1631 = vmatprep.subr.bf16.mxu0 %v1581
        %1632 = vmatpush1.bf16.msra.mxu0 %v1580
        %1633 = vmatprep.subr.bf16.mxu0 %v1583
        %1634 = vmatpush1.bf16.msra.mxu0 %v1582
        %1635 = vmatprep.subr.bf16.mxu0 %v1585
        %1636 = vmatpush1.bf16.msra.mxu0 %v1584
        %1637 = vmatprep.subr.bf16.mxu0 %v1587
        %1638 = vmatpush1.bf16.msra.mxu0 %v1586
        %1639 = vmatprep.subr.bf16.mxu0 %v1589
        %1640 = vmatpush1.bf16.msra.mxu0 %v1588
        %1641 = vmatprep.subr.bf16.mxu0 %v1591
        %1642 = vmatpush1.bf16.msra.mxu0 %v1590
        %1643 = vmatprep.subr.bf16.mxu0 %v1593
        %1644 = vmatpush1.bf16.msra.mxu0 %v1592
        %1645 = vmatprep.subr.bf16.mxu0 %v1595
        %1646 = vmatpush1.bf16.msra.mxu0 %v1594
        %1647 = vmatprep.subr.bf16.mxu0 %v1597
        %1648 = vmatpush1.bf16.msra.mxu0 %v1596
        %1649 = vmatprep.subr.bf16.mxu0 %v1599
        %1650 = vmatpush1.bf16.msra.mxu0 %v1598
        %1651 = vmatprep.subr.bf16.mxu0 %v1601
        %1652 = vmatpush1.bf16.msra.mxu0 %v1600
        %1653 = vmatprep.subr.bf16.mxu0 %v1603
        %1654 = vmatpush1.bf16.msra.mxu0 %v1602
        %1655 = vmatprep.subr.bf16.mxu0 0
        %1656 = vmatpush1.bf16.msra.mxu0 0
        %1657 = vmatprep.subr.bf16.mxu0 0
        %1658 = vmatpush1.bf16.msra.mxu0 0
        %1659 = vmatprep.subr.bf16.mxu0 0
        %1660 = vmatpush1.bf16.msra.mxu0 0
        %1661 = vmatprep.subr.bf16.mxu0 0
        %1662 = vmatpush1.bf16.msra.mxu0 0
        %1663 = vmatprep.mubr.bf16.mxu0 %v1629
        %1664 = vmatmul.mubr.bf16.gmra.mrb[0].mxu0 %v1470
        %v1665 = vpop.f32.mrb[0].mxu0
        %v1666 = vadd.f32 %v1501, %v1665
        %v1667 = vpop.f32.mrb[0].mxu0
        %v1668 = vadd.f32 %v1505, %v1667
        %v1669 = vpop.f32.mrb[0].mxu0
        %v1670 = vadd.f32 %v1501, %v1669
        %v1671 = vpop.f32.mrb[0].mxu0
        %v1672 = vadd.f32 %v1505, %v1671
        %1673 = vdwg.mxu0
        %v1674 = vtanh.pop %v1666
        %v1675 = vtanh.pop %v1670
        %v1676 = vmul.f32 %v1668, 0.5
        %v1677 = vmul.f32 %v1672, 0.5
        %v1678 = vtanh.pop %v1676
        %v1679 = vtanh.pop %v1677
        %v1680 = vmul.f32 %v1678, 0.5
        %v1681 = vmul.f32 %v1679, 0.5
        %v1682 = vadd.f32 %v1680, 0.5
        %v1683 = vadd.f32 %v1681, 0.5
        %v1684 = vmul.f32 %v1674, %v1682
        %v1685 = vmul.f32 %v1675, %v1683
        %v1686 = vpack.c.bf16 %v1685, %v1684
        %v1687 = vld [vmem:[%s13] sm:$0xf]
        %v1688 = vld [vmem:[%s13 + $0x4] sm:$0xf]
        %v1689 = vld [vmem:[%s13 + $0x8] sm:$0xf]
        %v1690 = vld [vmem:[%s13 + $0xc] sm:$0xf]
        %v1691 = vld [vmem:[%s13 + $0x10] sm:$0xf]
        %v1692 = vld [vmem:[%s13 + $0x14] sm:$0xf]
        %v1693 = vld [vmem:[%s13 + $0x18] sm:$0xf]
        %v1694 = vld [vmem:[%s13 + $0x1c] sm:$0xf]
        %v1695 = vld [vmem:[%s13 + $0x20] sm:$0xf]
        %v1696 = vld [vmem:[%s13 + $0x24] sm:$0xf]
        %v1697 = vld [vmem:[%s13 + $0x28] sm:$0xf]
        %v1698 = vld [vmem:[%s13 + $0x2c] sm:$0xf]
        %v1699 = vld [vmem:[%s13 + $0x30] sm:$0xf]
        %v1700 = vld [vmem:[%s13 + $0x34] sm:$0xf]
        %v1701 = vld [vmem:[%s13 + $0x38] sm:$0xf]
        %v1702 = vld [vmem:[%s13 + $0x3c] sm:$0xf]
        %v1719 = vunpack.c.l.b16 %v1687
        %v1720 = vunpack.c.l.b16 %v1688
        %v1721 = vunpack.c.l.b16 %v1689
        %v1722 = vunpack.c.l.b16 %v1690
        %v1723 = vunpack.c.l.b16 %v1691
        %v1724 = vunpack.c.l.b16 %v1692
        %v1725 = vunpack.c.l.b16 %v1693
        %v1726 = vunpack.c.l.b16 %v1694
        %v1727 = vunpack.c.l.b16 %v1695
        %v1728 = vunpack.c.l.b16 %v1696
        %v1729 = vunpack.c.l.b16 %v1697
        %v1730 = vunpack.c.l.b16 %v1698
        %v1731 = vunpack.c.l.b16 %v1699
        %v1732 = vunpack.c.l.b16 %v1700
        %v1733 = vunpack.c.l.b16 %v1701
        %v1734 = vunpack.c.l.b16 %v1702
        %v1735 = vpack.c.b16 %v1720, %v1719
        %v1736 = vpack.c.b16 %v1722, %v1721
        %v1737 = vpack.c.b16 %v1724, %v1723
        %v1738 = vpack.c.b16 %v1726, %v1725
        %v1739 = vpack.c.b16 %v1728, %v1727
        %v1740 = vpack.c.b16 %v1730, %v1729
        %v1741 = vpack.c.b16 %v1732, %v1731
        %v1742 = vpack.c.b16 %v1734, %v1733
        %1751 = vmatprep.subr.bf16.mxu0 0
        %1752 = vmatpush1.bf16.msra.mxu0 %v1735
        %1753 = vmatprep.subr.bf16.mxu0 0
        %1754 = vmatpush1.bf16.msra.mxu0 %v1736
        %1755 = vmatprep.subr.bf16.mxu0 0
        %1756 = vmatpush1.bf16.msra.mxu0 %v1737
        %1757 = vmatprep.subr.bf16.mxu0 0
        %1758 = vmatpush1.bf16.msra.mxu0 %v1738
        %1759 = vmatprep.subr.bf16.mxu0 0
        %1760 = vmatpush1.bf16.msra.mxu0 %v1739
        %1761 = vmatprep.subr.bf16.mxu0 0
        %1762 = vmatpush1.bf16.msra.mxu0 %v1740
        %1763 = vmatprep.subr.bf16.mxu0 0
        %1764 = vmatpush1.bf16.msra.mxu0 %v1741
        %1765 = vmatprep.subr.bf16.mxu0 0
        %1766 = vmatpush1.bf16.msra.mxu0 %v1742
        %1767 = vmatprep.subr.bf16.mxu0 0
        %1768 = vmatpush1.bf16.msra.mxu0 0
        %1769 = vmatprep.subr.bf16.mxu0 0
        %1770 = vmatpush1.bf16.msra.mxu0 0
        %1771 = vmatprep.subr.bf16.mxu0 0
        %1772 = vmatpush1.bf16.msra.mxu0 0
        %1773 = vmatprep.subr.bf16.mxu0 0
        %1774 = vmatpush1.bf16.msra.mxu0 0
        %1775 = vmatprep.subr.bf16.mxu0 0
        %1776 = vmatpush1.bf16.msra.mxu0 0
        %1777 = vmatprep.subr.bf16.mxu0 0
        %1778 = vmatpush1.bf16.msra.mxu0 0
        %1779 = vmatprep.subr.bf16.mxu0 0
        %1780 = vmatpush1.bf16.msra.mxu0 0
        %1781 = vmatprep.subr.bf16.mxu0 0
        %1782 = vmatpush1.bf16.msra.mxu0 0
        %1783 = vmatprep.mubr.bf16.mxu0 0
        %1784 = vmatmul.mubr.bf16.gmra.mrb[0].mxu0 %v1686
        %v1785 = vpop.f32.mrb[0].mxu0
        %v1786 = vadd.f32 0.0, %v1785
        %v1787 = vpop.f32.mrb[0].mxu0
        %v1788 = vpop.f32.mrb[0].mxu0
        %v1789 = vadd.f32 0.0, %v1788
        %v1790 = vpop.f32.mrb[0].mxu0
        %1791 = vdwg.mxu0
        %v1792 = vadd.f32 %v1435, %v1786
        %v1793 = vadd.f32 %v1436, %v1789
        %v1794 = vld [vmem:[#allocation13] sm:$0x1]
        %v1796 = vlaneseq
        %v1797 = vshrl.u32 %v1796, 7
        %v1798 = vsub.s32 0, %v1797
        %v1799 = vrot.slane %v1794, %v1798
        %v1801 = vadd.f32 %v1792, %v1799
        %v1802 = vadd.f32 %v1793, %v1799
        %v1803 = vsel %vm726, %v1801, 0.0
        %v1804 = vsel %vm726, %v1802, 0.0
        %v1805 = vadd.f32 %v1803, %v1804
        %v1806 = vrot.slane %v1805, 4
        %v1807 = vadd.f32 %v1805, %v1806
        %v1808 = vrot.slane %v1807, 2
        %v1809 = vadd.f32 %v1807, %v1808
        %v1810 = vrot.slane %v1809, 1
        %v1811 = vadd.f32 %v1809, %v1810
        %v1812 = vrcp.pop 16.0
        %v1813 = vmul.f32 %v1811, %v1812
        %v1814 = vsel %vm726, %v1813, 0.0
        %1815 = vst [vmem:[%s593] sm:$0x1] %v1814
        %p1816 = scmp.lt.s32.totalorder %s31, 1
        %s1817 = scalar_select %p1816, %s31, 1
        %s1818 = scalar_lea.vmem %s15, %s1817
        // Predicated region
        $region113: #{wavenet1d_forward.1} parent=79 // pred_check
          %p1819 = pneg %p369
        $region114: #{wavenet1d_forward.1} parent=79 // pred_check_branch
          %1821 = sbr.rel (%p1819) target = $region116
        $region115: #{wavenet1d_forward.1} parent=79 // pred_region
          _
        $region116: #{wavenet1d_forward.1} parent=79 // pred_fallthru
          _
      $region80: #{wavenet1d_forward.1} parent=5 // pred_fallthru
        _
      %p1822 = scmp.le.s32.totalorder 2, %s26
      // Predicated region
      $region117: #{wavenet1d_forward.1} parent=5 // pred_check
        %p1823 = pneg %p1822
      $region118: #{wavenet1d_forward.1} parent=5 // pred_check_branch
        %1825 = sbr.rel (%p1823) target = $region120
      $region119: #{wavenet1d_forward.1} parent=5 // pred_region
        %s1826 = ssub.s32 %s26, 2
        // Predicated region
        $region121: #{wavenet1d_forward.1} parent=119 // pred_check
          %p1827 = pneg %p375
        $region122: #{wavenet1d_forward.1} parent=119 // pred_check_branch
          %1829 = sbr.rel (%p1827) target = $region124
        $region123: #{wavenet1d_forward.1} parent=119 // pred_region
          %p1830 = scmp.lt.s32.totalorder %s32, 1
          %s1831 = scalar_select %p1830, %s32, 1
          %s1832 = scalar_lea.vmem %s15, %s1831
        $region124: #{wavenet1d_forward.1} parent=119 // pred_fallthru
          _
      $region120: #{wavenet1d_forward.1} parent=5 // pred_fallthru
        _
    $region6: #{wavenet1d_forward.1} parent=1 // loop_footer
      %s30 = sadd.s32 1, %s26
    $region7: #{wavenet1d_forward.1} parent=1 // loop_footer_branch
      %25 = sbr.rel target = $region3
    $region8: #{wavenet1d_forward.1} parent=1 // loop_exit
      _
    %1833 = vsyncpa [#allocation3], 1
    %s1834 = scalar_lea.sflag [#allocation3], 1
    %1835 = vsyncpa %s1834, 1
    %1836 = vsyncpa [#allocation5], 1
    %1837 = vsyncpa [#allocation8], 1
    %1838 = vsyncpa [#allocation11], 1
    %1839 = vsyncpa [#allocation14], 1

</llo_original>
